<compile_context>
chip_gen: v7x
topology: tpu7x:2x2x1
jax: 0.10.0
libtpu: 0.0.40
codegen_flags: <defaults>
</compile_context>

<pallas_src>
import functools

import jax
import jax.numpy as jnp
from jax.experimental import pallas as pl
from jax.experimental.pallas import tpu as pltpu


def _round_up(x, m):
    return (x + m - 1) // m * m


def _gcn_kernel(layers, mem_dim, head_dim, adj_ref, x_ref, *refs):
    """One grid step == TB graphs.

    refs layout (parameter blocks are full arrays, resident across the grid):
      for l in range(layers): W_l (mem_dim + l*head_dim, head_dim) bf16,
                              b_l (1, head_dim) f32
      then W_out (mem_dim, Dpad) bf16, b_out (1, Dpad) f32,
      then out_ref (TB*N, Dpad) f32.
    """
    D, h = mem_dim, head_dim
    w_refs = [refs[2 * l] for l in range(layers)]
    b_refs = [refs[2 * l + 1] for l in range(layers)]
    wout_ref = refs[2 * layers]
    bout_ref = refs[2 * layers + 1]
    out_ref = refs[2 * layers + 2]

    adj = adj_ref[...]                               # (TB, N, N) bf16 (0/1 exact)
    x = x_ref[...]                                   # (TB, N, D)  f32
    TB, N, _ = x.shape

    # Degree normalizer, hoisted out of the layer loop (adj is 0/1, so the bf16
    # storage and the f32 sum are exact).  Reciprocal rides the idle EUP slot.
    denom = jnp.sum(adj.astype(jnp.float32), axis=2, keepdims=True) + 1.0
    inv_denom = pl.reciprocal(denom, approx=True).reshape(TB * N, 1)

    x_flat = x.reshape(TB * N, D)
    x_bf = x_flat.astype(jnp.bfloat16)

    def adj_matmul(v_bf):
        """adj @ v for TB graphs; bf16 MXU operands, f32 acc, cached as bf16."""
        f = v_bf.shape[-1]
        av = jnp.einsum("bij,bjd->bid", adj, v_bf.reshape(TB, N, f),
                        preferred_element_type=jnp.float32)
        return av.reshape(TB * N, f).astype(jnp.bfloat16)

    # Split-weight formulation: outputs_l = concat([x, g_0, ..., g_{l-1}])  =>
    #   (adj @ outputs_l) @ W_l = sum_j (adj @ cache_j) @ W_l[rows_j]
    # Each adj @ cache_j is computed exactly once and reused by later layers,
    # so no jnp.concatenate appears anywhere in the kernel.
    a_cache = [adj_matmul(x_bf)]                     # adj @ x, (TB*N, D) bf16
    g_list = []
    for l in range(layers):                          # `layers` is static
        w = w_refs[l][...]                           # (D + l*h, h) bf16
        axw = jnp.dot(a_cache[0], w[:D], preferred_element_type=jnp.float32)
        for j in range(1, l + 1):
            axw += jnp.dot(a_cache[j], w[D + (j - 1) * h: D + j * h],
                           preferred_element_type=jnp.float32)
        # TODO(synk): self_loop=True branch (AxW += outputs @ W_l) not
        # implemented (module default is self_loop=False).
        axw = (axw + b_refs[l][...]) * inv_denom
        g = jnp.maximum(axw, 0.0)                    # ReLU, f32, (TB*N, h)
        # TODO(synk): dropout treated as identity (eval-mode / deterministic).
        g_list.append(g)
        if l + 1 < layers:
            a_cache.append(adj_matmul(g.astype(jnp.bfloat16)))

    # out = (concat(g_list) + x) @ W_out + b_out, with the concat folded into a
    # per-slice accumulation (requires layers * head_dim == mem_dim — the same
    # implicit assumption the PyTorch residual makes).
    wout = wout_ref[...]                             # (D, Dpad) bf16
    acc = None
    for l in range(layers):
        resid = g_list[l] + x_flat[:, l * h:(l + 1) * h]
        term = jnp.dot(resid.astype(jnp.bfloat16), wout[l * h:(l + 1) * h],
                       preferred_element_type=jnp.float32)
        acc = term if acc is None else acc + term
    out_ref[...] = (acc + bout_ref[...]).astype(out_ref.dtype)


def graph_conv_layer(adj, x, weights, biases, w_out, b_out, *, batch_block=8):
    """adj: (B,N,N), x: (B,N,mem_dim) f32. Returns (B,N,mem_dim) f32.

    weights[l]: (mem_dim + head_dim*l, head_dim), w_out: (mem_dim, mem_dim)
    (both pre-transposed to (in, out)).  For larger batches raise
    `batch_block` (v6e: 512+ rows per step approaches the HBM roofline).
    """
    B, N, D = x.shape
    layers = len(weights)
    h = weights[0].shape[1]
    if layers * h != D:
        raise ValueError("residual requires layers * head_dim == mem_dim")
    for l, w in enumerate(weights):
        if w.shape != (D + l * h, h):
            raise ValueError(f"weight_list[{l}] must have shape "
                             f"({D + l * h}, {h}), got {w.shape}")

    # Graphs per grid step (largest divisor of B <= batch_block); keep >= 2
    # grid steps when possible so both v7x TensorCores get work.
    tb = min(batch_block, B)
    while B % tb:
        tb -= 1
    if B // tb < 2 <= B and tb > 1:
        tb = max((d for d in range(1, tb) if B % d == 0), default=1)
    grid = (B // tb,)

    # Lane-dense output: pad the projection output columns to a multiple of 128
    # so the final store is a full-lane (unmasked) vst; sliced off below.
    d_pad = _round_up(D, 128)

    x = x.astype(jnp.float32)
    adj_bf = adj.astype(jnp.bfloat16)       # 0/1 adjacency is exact in bf16

    args = [adj_bf, x]
    in_specs = [
        pl.BlockSpec((tb, N, N), lambda b: (b, 0, 0)),
        pl.BlockSpec((tb, N, D), lambda b: (b, 0, 0)),
    ]

    def add_param(p):
        # Full-array block with a constant index_map: fetched once and reused
        # by every grid step (no per-step re-DMA).
        args.append(p)
        in_specs.append(pl.BlockSpec(p.shape, lambda b: (0, 0)))

    for l in range(layers):
        add_param(weights[l].astype(jnp.bfloat16))               # (D + l*h, h)
        add_param(jnp.reshape(biases[l], (1, h)).astype(jnp.float32))
    add_param(jnp.pad(w_out, ((0, 0), (0, d_pad - D))).astype(jnp.bfloat16))
    add_param(jnp.pad(jnp.reshape(b_out, (1, D)),
                      ((0, 0), (0, d_pad - D))).astype(jnp.float32))

    out_spec = pl.BlockSpec((tb * N, d_pad), lambda b: (b, 0))

    # VMEM budget: double-buffered adj/x/out blocks + double-buffered params +
    # slack, clamped to [32 MiB, 64 MiB] so the setting is valid on v7x (64 MiB
    # physical) while v5e/v6e (128 MiB) can raise it for larger tiles.
    # TODO(synk): for very large N (>~1.5k nodes) add an 'arbitrary' neighbor
    # grid axis so the (N, N) adjacency block is contracted in tiles.
    block_bytes = 2 * (tb * N * N * 2 + tb * N * D * 4 + tb * N * d_pad * 4)
    param_bytes = 2 * sum(int(a.size) * a.dtype.itemsize for a in args[2:])
    vmem_limit = int(min(max(block_bytes + param_bytes + (8 << 20), 32 << 20),
                         64 << 20))

    kernel = functools.partial(_gcn_kernel, layers, D, h)
    out_flat = pl.pallas_call(
        kernel,
        out_shape=jax.ShapeDtypeStruct((B * N, d_pad), jnp.float32),
        grid_spec=pltpu.PrefetchScalarGridSpec(
            num_scalar_prefetch=0,
            grid=grid,
            in_specs=in_specs,
            out_specs=out_spec,
        ),
        compiler_params=pltpu.CompilerParams(
            dimension_semantics=("parallel",),
            vmem_limit_bytes=vmem_limit,
        ),
    )(*args)

    return out_flat[:, :D].reshape(B, N, D)


if __name__ == "__main__":
    B, N, mem_dim, layers = 16, 16, 64, 2
    head_dim = mem_dim // layers

    key = jax.random.PRNGKey(0)
    ks = jax.random.split(key, 4 + 2 * layers)

    # Sparse-ish 0/1 adjacency, float activations.
    adj = (jax.random.uniform(ks[0], (B, N, N)) > 0.7).astype(jnp.float32)
    x = jax.random.normal(ks[1], (B, N, mem_dim), dtype=jnp.float32)

    # Synthetic parameters (shapes from __init__):
    #   weight_list[l]: Linear(mem_dim + head_dim*l -> head_dim)
    #   linear_output : Linear(mem_dim -> mem_dim)
    weights, biases = [], []
    for l in range(layers):
        in_dim = mem_dim + head_dim * l
        weights.append(0.1 * jax.random.normal(
            ks[2 + 2 * l], (in_dim, head_dim), dtype=jnp.float32))
        biases.append(0.1 * jax.random.normal(
            ks[3 + 2 * l], (1, head_dim), dtype=jnp.float32))
    w_out = 0.1 * jax.random.normal(
        ks[2 + 2 * layers], (mem_dim, mem_dim), dtype=jnp.float32)
    b_out = 0.1 * jax.random.normal(
        ks[3 + 2 * layers], (1, mem_dim), dtype=jnp.float32)

    out = graph_conv_layer(adj, x, weights, biases, w_out, b_out)
    out = jax.block_until_ready(out)

    # Pure-JAX f32 reference (mirrors the PyTorch forward, dropout = identity).
    def ref_fn(adj, x):
        denom = adj.sum(2)[..., None] + 1.0
        outputs = x
        cache = [x]
        outs = []
        for l in range(layers):
            Ax = jnp.einsum('bij,bjd->bid', adj, outputs)
            AxW = Ax @ weights[l] + biases[l]
            gAxW = jax.nn.relu(AxW / denom)
            cache.append(gAxW)
            outputs = jnp.concatenate(cache, axis=2)
            outs.append(gAxW)
        g = jnp.concatenate(outs, axis=2) + x
        return g @ w_out + b_out

    expected = ref_fn(adj, x)
    assert out.shape == (B, N, mem_dim)
    # bf16 MXU operands (f32 accumulation) loosen numerics vs the f32 reference.
    assert jnp.allclose(out, expected, atol=2e-2, rtol=2e-2), "mismatch vs reference"
    rel = jnp.linalg.norm(out - expected) / jnp.linalg.norm(expected)
    assert rel < 1e-2, f"relative error too large: {rel}"
    print("KERNEL_OK")
</pallas_src>

<mosaic_0001>
module attributes {stable_mosaic.version = 11 : i64} {
  func.func @_gcn_kernel(%arg0: i32, %arg1: memref<8x16x16xbf16, #tpu.memory_space<vmem>>, %arg2: memref<8x16x64xf32, #tpu.memory_space<vmem>>, %arg3: memref<64x32xbf16, #tpu.memory_space<vmem>>, %arg4: memref<1x32xf32, #tpu.memory_space<vmem>>, %arg5: memref<96x32xbf16, #tpu.memory_space<vmem>>, %arg6: memref<1x32xf32, #tpu.memory_space<vmem>>, %arg7: memref<64x128xbf16, #tpu.memory_space<vmem>>, %arg8: memref<1x128xf32, #tpu.memory_space<vmem>>, %arg9: memref<128x128xf32, #tpu.memory_space<vmem>>) attributes {dimension_semantics = [#tpu.dimension_semantics<parallel>], iteration_bounds = array<i64: 2>, scalar_prefetch = 0 : i64, scratch_operands = 0 : i64, tpu.core_type = #tpu.core_type<tc>, window_params = [{transform_indices = @transform_0, window_bounds = array<i64: 8, 16, 16>}, {transform_indices = @transform_1, window_bounds = array<i64: 8, 16, 64>}, {pipeline_mode = #tpu.pipeline_mode<synchronous>, transform_indices = @transform_2, window_bounds = array<i64: 64, 32>}, {pipeline_mode = #tpu.pipeline_mode<synchronous>, transform_indices = @transform_3, window_bounds = array<i64: 1, 32>}, {pipeline_mode = #tpu.pipeline_mode<synchronous>, transform_indices = @transform_4, window_bounds = array<i64: 96, 32>}, {pipeline_mode = #tpu.pipeline_mode<synchronous>, transform_indices = @transform_5, window_bounds = array<i64: 1, 32>}, {pipeline_mode = #tpu.pipeline_mode<synchronous>, transform_indices = @transform_6, window_bounds = array<i64: 64, 128>}, {pipeline_mode = #tpu.pipeline_mode<synchronous>, transform_indices = @transform_7, window_bounds = array<i64: 1, 128>}, {transform_indices = @transform_8, window_bounds = array<i64: 128, 128>}]} {
    %c0 = arith.constant 0 : index
    %c0_0 = arith.constant 0 : index
    %c0_1 = arith.constant 0 : index
    %0 = vector.load %arg1[%c0, %c0_0, %c0_1] : memref<8x16x16xbf16, #tpu.memory_space<vmem>>, vector<8x16x16xbf16>
    %c0_2 = arith.constant 0 : index
    %c0_3 = arith.constant 0 : index
    %c0_4 = arith.constant 0 : index
    %1 = vector.load %arg2[%c0_2, %c0_3, %c0_4] : memref<8x16x64xf32, #tpu.memory_space<vmem>>, vector<8x16x64xf32>
    %2 = arith.extf %0 : vector<8x16x16xbf16> to vector<8x16x16xf32>
    %cst = arith.constant dense<0.000000e+00> : vector<8x16xf32>
    %3 = vector.multi_reduction <add>, %2, %cst [2] : vector<8x16x16xf32> to vector<8x16xf32>
    %4 = vector.shape_cast %3 : vector<8x16xf32> to vector<8x16x1xf32>
    %cst_5 = arith.constant 1.000000e+00 : f32
    %5 = vector.broadcast %cst_5 : f32 to vector<8x16x1xf32>
    %6 = arith.addf %4, %5 : vector<8x16x1xf32>
    %7 = tpu.reciprocal %6 {approx = true} : vector<8x16x1xf32> -> vector<8x16x1xf32>
    %8 = vector.shape_cast %7 : vector<8x16x1xf32> to vector<128x1xf32>
    %9 = vector.shape_cast %1 : vector<8x16x64xf32> to vector<128x64xf32>
    %10 = arith.truncf %9 : vector<128x64xf32> to vector<128x64xbf16>
    %11 = vector.shape_cast %10 : vector<128x64xbf16> to vector<8x16x64xbf16>
    "tpu.trace_start"() <{level = 10 : i32, message = "bij,bjd->bid"}> : () -> ()
    %cst_6 = arith.constant dense<0.000000e+00> : vector<8x16x64xf32>
    %12 = tpu.matmul %0, %11, %cst_6 {dimension_numbers = #tpu.dot_dimension_numbers<[2], [1], [1], [2], [0, 0, 0, 1, 1, 2], [0], [0]>} : vector<8x16x16xbf16>, vector<8x16x64xbf16>, vector<8x16x64xf32> -> vector<8x16x64xf32>
    "tpu.trace_stop"() : () -> ()
    %13 = vector.shape_cast %12 : vector<8x16x64xf32> to vector<128x64xf32>
    %14 = arith.truncf %13 : vector<128x64xf32> to vector<128x64xbf16>
    %c0_7 = arith.constant 0 : index
    %c0_8 = arith.constant 0 : index
    %15 = vector.load %arg3[%c0_7, %c0_8] : memref<64x32xbf16, #tpu.memory_space<vmem>>, vector<64x32xbf16>
    %cst_9 = arith.constant dense<0.000000e+00> : vector<128x32xf32>
    %16 = tpu.matmul %14, %15, %cst_9 {dimension_numbers = #tpu.dot_dimension_numbers<[1], [0], [0], [1], [0, 0, 1, 1], [], []>} : vector<128x64xbf16>, vector<64x32xbf16>, vector<128x32xf32> -> vector<128x32xf32>
    %c0_10 = arith.constant 0 : index
    %c0_11 = arith.constant 0 : index
    %17 = vector.load %arg4[%c0_10, %c0_11] : memref<1x32xf32, #tpu.memory_space<vmem>>, vector<1x32xf32>
    %18 = vector.broadcast %17 : vector<1x32xf32> to vector<128x32xf32>
    %19 = arith.addf %16, %18 : vector<128x32xf32>
    %20 = vector.broadcast %8 : vector<128x1xf32> to vector<128x32xf32>
    %21 = arith.mulf %19, %20 : vector<128x32xf32>
    %cst_12 = arith.constant 0.000000e+00 : f32
    %22 = vector.broadcast %cst_12 : f32 to vector<128x32xf32>
    %23 = arith.maximumf %21, %22 : vector<128x32xf32>
    %24 = arith.truncf %23 : vector<128x32xf32> to vector<128x32xbf16>
    %25 = vector.shape_cast %24 : vector<128x32xbf16> to vector<8x16x32xbf16>
    "tpu.trace_start"() <{level = 10 : i32, message = "bij,bjd->bid"}> : () -> ()
    %cst_13 = arith.constant dense<0.000000e+00> : vector<8x16x32xf32>
    %26 = tpu.matmul %0, %25, %cst_13 {dimension_numbers = #tpu.dot_dimension_numbers<[2], [1], [1], [2], [0, 0, 0, 1, 1, 2], [0], [0]>} : vector<8x16x16xbf16>, vector<8x16x32xbf16>, vector<8x16x32xf32> -> vector<8x16x32xf32>
    "tpu.trace_stop"() : () -> ()
    %27 = vector.shape_cast %26 : vector<8x16x32xf32> to vector<128x32xf32>
    %28 = arith.truncf %27 : vector<128x32xf32> to vector<128x32xbf16>
    %c0_14 = arith.constant 0 : index
    %c0_15 = arith.constant 0 : index
    %29 = vector.load %arg5[%c0_14, %c0_15] : memref<96x32xbf16, #tpu.memory_space<vmem>>, vector<96x32xbf16>
    %30 = vector.extract_strided_slice %29 {offsets = [0, 0], sizes = [64, 32], strides = [1, 1]} : vector<96x32xbf16> to vector<64x32xbf16>
    %cst_16 = arith.constant dense<0.000000e+00> : vector<128x32xf32>
    %31 = tpu.matmul %14, %30, %cst_16 {dimension_numbers = #tpu.dot_dimension_numbers<[1], [0], [0], [1], [0, 0, 1, 1], [], []>} : vector<128x64xbf16>, vector<64x32xbf16>, vector<128x32xf32> -> vector<128x32xf32>
    %32 = vector.extract_strided_slice %29 {offsets = [64, 0], sizes = [32, 32], strides = [1, 1]} : vector<96x32xbf16> to vector<32x32xbf16>
    %cst_17 = arith.constant dense<0.000000e+00> : vector<128x32xf32>
    %33 = tpu.matmul %28, %32, %cst_17 {dimension_numbers = #tpu.dot_dimension_numbers<[1], [0], [0], [1], [0, 0, 1, 1], [], []>} : vector<128x32xbf16>, vector<32x32xbf16>, vector<128x32xf32> -> vector<128x32xf32>
    %34 = arith.addf %31, %33 : vector<128x32xf32>
    %c0_18 = arith.constant 0 : index
    %c0_19 = arith.constant 0 : index
    %35 = vector.load %arg6[%c0_18, %c0_19] : memref<1x32xf32, #tpu.memory_space<vmem>>, vector<1x32xf32>
    %36 = vector.broadcast %35 : vector<1x32xf32> to vector<128x32xf32>
    %37 = arith.addf %34, %36 : vector<128x32xf32>
    %38 = vector.broadcast %8 : vector<128x1xf32> to vector<128x32xf32>
    %39 = arith.mulf %37, %38 : vector<128x32xf32>
    %cst_20 = arith.constant 0.000000e+00 : f32
    %40 = vector.broadcast %cst_20 : f32 to vector<128x32xf32>
    %41 = arith.maximumf %39, %40 : vector<128x32xf32>
    %c0_21 = arith.constant 0 : index
    %c0_22 = arith.constant 0 : index
    %42 = vector.load %arg7[%c0_21, %c0_22] : memref<64x128xbf16, #tpu.memory_space<vmem>>, vector<64x128xbf16>
    %43 = vector.extract_strided_slice %9 {offsets = [0, 0], sizes = [128, 32], strides = [1, 1]} : vector<128x64xf32> to vector<128x32xf32>
    %44 = arith.addf %23, %43 : vector<128x32xf32>
    %45 = arith.truncf %44 : vector<128x32xf32> to vector<128x32xbf16>
    %46 = vector.extract_strided_slice %42 {offsets = [0, 0], sizes = [32, 128], strides = [1, 1]} : vector<64x128xbf16> to vector<32x128xbf16>
    %cst_23 = arith.constant dense<0.000000e+00> : vector<128x128xf32>
    %47 = tpu.matmul %45, %46, %cst_23 {dimension_numbers = #tpu.dot_dimension_numbers<[1], [0], [0], [1], [0, 0, 1, 1], [], []>} : vector<128x32xbf16>, vector<32x128xbf16>, vector<128x128xf32> -> vector<128x128xf32>
    %48 = vector.extract_strided_slice %9 {offsets = [0, 32], sizes = [128, 32], strides = [1, 1]} : vector<128x64xf32> to vector<128x32xf32>
    %49 = arith.addf %41, %48 : vector<128x32xf32>
    %50 = arith.truncf %49 : vector<128x32xf32> to vector<128x32xbf16>
    %51 = vector.extract_strided_slice %42 {offsets = [32, 0], sizes = [32, 128], strides = [1, 1]} : vector<64x128xbf16> to vector<32x128xbf16>
    %cst_24 = arith.constant dense<0.000000e+00> : vector<128x128xf32>
    %52 = tpu.matmul %50, %51, %cst_24 {dimension_numbers = #tpu.dot_dimension_numbers<[1], [0], [0], [1], [0, 0, 1, 1], [], []>} : vector<128x32xbf16>, vector<32x128xbf16>, vector<128x128xf32> -> vector<128x128xf32>
    %53 = arith.addf %47, %52 : vector<128x128xf32>
    %c0_25 = arith.constant 0 : index
    %c0_26 = arith.constant 0 : index
    %54 = vector.load %arg8[%c0_25, %c0_26] : memref<1x128xf32, #tpu.memory_space<vmem>>, vector<1x128xf32>
    %55 = vector.broadcast %54 : vector<1x128xf32> to vector<128x128xf32>
    %56 = arith.addf %53, %55 : vector<128x128xf32>
    %c0_27 = arith.constant 0 : index
    %c0_28 = arith.constant 0 : index
    %57 = vector.load %arg9[%c0_27, %c0_28] : memref<128x128xf32, #tpu.memory_space<vmem>>, vector<128x128xf32>
    tpu.vector_store %arg9[%c0_27, %c0_28], %56 {strides = array<i32>} : memref<128x128xf32, #tpu.memory_space<vmem>>, vector<128x128xf32>,
    return
  }
  func.func @transform_0(%arg0: i32) -> (i32, i32, i32) {
    %c0_i32 = arith.constant 0 : i32
    %c0_i32_0 = arith.constant 0 : i32
    %c0_i32_1 = arith.constant 0 : i32
    return %arg0, %c0_i32, %c0_i32_0 : i32, i32, i32
  }
  func.func @transform_1(%arg0: i32) -> (i32, i32, i32) {
    %c0_i32 = arith.constant 0 : i32
    %c0_i32_0 = arith.constant 0 : i32
    %c0_i32_1 = arith.constant 0 : i32
    return %arg0, %c0_i32, %c0_i32_0 : i32, i32, i32
  }
  func.func @transform_2(%arg0: i32) -> (i32, i32) {
    %c0_i32 = arith.constant 0 : i32
    %c0_i32_0 = arith.constant 0 : i32
    %c0_i32_1 = arith.constant 0 : i32
    return %c0_i32, %c0_i32_0 : i32, i32
  }
  func.func @transform_3(%arg0: i32) -> (i32, i32) {
    %c0_i32 = arith.constant 0 : i32
    %c0_i32_0 = arith.constant 0 : i32
    %c0_i32_1 = arith.constant 0 : i32
    return %c0_i32, %c0_i32_0 : i32, i32
  }
  func.func @transform_4(%arg0: i32) -> (i32, i32) {
    %c0_i32 = arith.constant 0 : i32
    %c0_i32_0 = arith.constant 0 : i32
    %c0_i32_1 = arith.constant 0 : i32
    return %c0_i32, %c0_i32_0 : i32, i32
  }
  func.func @transform_5(%arg0: i32) -> (i32, i32) {
    %c0_i32 = arith.constant 0 : i32
    %c0_i32_0 = arith.constant 0 : i32
    %c0_i32_1 = arith.constant 0 : i32
    return %c0_i32, %c0_i32_0 : i32, i32
  }
  func.func @transform_6(%arg0: i32) -> (i32, i32) {
    %c0_i32 = arith.constant 0 : i32
    %c0_i32_0 = arith.constant 0 : i32
    %c0_i32_1 = arith.constant 0 : i32
    return %c0_i32, %c0_i32_0 : i32, i32
  }
  func.func @transform_7(%arg0: i32) -> (i32, i32) {
    %c0_i32 = arith.constant 0 : i32
    %c0_i32_0 = arith.constant 0 : i32
    %c0_i32_1 = arith.constant 0 : i32
    return %c0_i32, %c0_i32_0 : i32, i32
  }
  func.func @transform_8(%arg0: i32) -> (i32, i32) {
    %c0_i32 = arith.constant 0 : i32
    %c0_i32_0 = arith.constant 0 : i32
    return %arg0, %c0_i32 : i32, i32
  }
}

</mosaic_0001>

<llo_original>
// kernel: tpu_custom_call.1
$region0: #{tpu_custom_call.1}
  #allocation0 [shape = 'u32[]', space=smem, size = 0x4, offset = 0x4, fixed_abs, tag = 'smem constant byte address 0x4 - core index']
  #allocation1 [shape = 'u32[144,128]{1,0:T(1,128)}', space=vmem, size = 0x12000, scoped, tag = 'internal scratch']
  %s0 = inlined_call_operand.hbm [shape: bf16[16,16,16], index: 0, kind: input, shape index: {}]
  %s1 = inlined_call_operand.hbm [shape: f32[16,16,64], index: 1, kind: input, shape index: {}]
  %s2 = inlined_call_operand.vmem [shape: bf16[64,32], index: 2, kind: input, shape index: {}]
  %s3 = inlined_call_operand.vmem [shape: f32[1,32], index: 3, kind: input, shape index: {}]
  %s4 = inlined_call_operand.vmem [shape: bf16[96,32], index: 4, kind: input, shape index: {}]
  %s5 = inlined_call_operand.vmem [shape: f32[1,32], index: 5, kind: input, shape index: {}]
  %s6 = inlined_call_operand.vmem [shape: bf16[64,128], index: 6, kind: input, shape index: {}]
  %s7 = inlined_call_operand.vmem [shape: f32[1,128], index: 7, kind: input, shape index: {}]
  %s8 = inlined_call_operand.hbm [shape: f32[256,128], index: 8, kind: output, shape index: {}]
  %s9 = sld [smem:[#allocation0]]
  $region73: #{tpu_custom_call.1} parent=0
    _
  %s11 = ssub.s32 1, %s9
  %s12 = scalar_select 0, %s11, %s9
  $region1: #{tpu_custom_call.1} parent=0
    #allocation2 [shape = 'u8[65536]{0}', space=vmem, size = 0x10000, scoped, tag = 'input window, operand 0']
    #allocation3 [shape = 's32[2]{0}', space=sflag, size = 0x8, scoped, tag = 'scoped memory for tpu_custom_call.1']
    #allocation4 [shape = 's32[2]{0}', space=sflag, size = 0x8, scoped, tag = 'scoped memory for tpu_custom_call.1']
    #allocation5 [shape = 'u8[131072]{0}', space=vmem, size = 0x20000, scoped, tag = 'input window, operand 1']
    #allocation6 [shape = 's32[2]{0}', space=sflag, size = 0x8, scoped, tag = 'scoped memory for tpu_custom_call.1']
    #allocation7 [shape = 'u8[131072]{0}', space=vmem, size = 0x20000, scoped, tag = 'output window, operand 0']
    %13 = vsyncpa [#allocation3], 0
    %s14 = scalar_lea.sflag [#allocation3], 1
    %15 = vsyncpa %s14, 0
    %16 = vsyncpa [#allocation6], 0
    %s17 = scalar_lea.sflag [#allocation6], 1
    %18 = vsyncpa %s17, 0
    %19 = vsyncpa [#allocation4], 0
    %s20 = scalar_lea.sflag [#allocation4], 1
    %21 = vsyncpa %s20, 0
    loop: start=0, step=1, limit=4
    $region2: #{tpu_custom_call.1} parent=1 // loop_pre_header
      _
    $region3: #{tpu_custom_call.1} parent=1 // loop_header
      %s23 = sphi 0, %s27
      %p24 = scmp.ge.s32.totalorder %s23, 4
      %s33 = sphi 0, %s35
      %s36 = sphi 0, %s33
      %s37 = sphi 0, %s36
      %s53 = sphi 0, %s37
      %s59 = sphi 0, %s61
      %s62 = sphi 0, %s59
      %s63 = sphi 0, %s62
      %s79 = sphi 0, %s63
      %s83 = sphi 0, %s83
      %s85 = sphi 0, %s83
      %s86 = sphi 0, %s85
      %s100 = sphi 0, %s86
      %s104 = sphi 0, %s104
      %s106 = sphi 0, %s104
      %s107 = sphi 0, %s106
      %s121 = sphi 0, %s107
      %s125 = sphi 0, %s125
      %s127 = sphi 0, %s125
      %s128 = sphi 0, %s127
      %s142 = sphi 0, %s128
      %s146 = sphi 0, %s146
      %s148 = sphi 0, %s146
      %s149 = sphi 0, %s148
      %s163 = sphi 0, %s149
      %s167 = sphi 0, %s167
      %s169 = sphi 0, %s167
      %s170 = sphi 0, %s169
      %s184 = sphi 0, %s170
      %s188 = sphi 0, %s188
      %s190 = sphi 0, %s188
      %s191 = sphi 0, %s190
      %s205 = sphi 0, %s191
      %s211 = sphi 0, %s213
      %s214 = sphi 0, %s211
      %s215 = sphi 0, %s214
      %s231 = sphi 0, %s215
    $region4: #{tpu_custom_call.1} parent=1 // loop_header_branch
      %26 = sbr.rel (%p24) target = $region8
    $region5: #{tpu_custom_call.1} parent=1 // loop_body
      %s28 = ssub.s32 %s23, 1
      %s29 = ssub.s32 %s23, 2
      %s30 = sadd.s32 %s23, 1
      %s31 = ssub.s32 %s23, %s30
      %p32 = scmp.eq.s32.totalorder %s31, 0
      %s34 = sadd.s32 %s33, 1
      %s35 = scalar_select %p32, %s33, %s34
      %p38 = pneg %p32
      %p39 = scmp.eq.s32.totalorder %s23, 1
      %p40 = por %p38, %p39
      %p41 = scmp.ne.s32.totalorder %s33, %s36
      %p42 = scmp.eq.s32.totalorder %s23, 0
      %p43 = por %p41, %p42
      %p44 = scmp.ne.s32.totalorder %s33, %s36
      %p45 = scmp.eq.s32.totalorder %s28, 1
      %p46 = por %p44, %p45
      %p47 = scmp.ne.s32.totalorder %s36, %s37
      %p48 = scmp.eq.s32.totalorder %s28, 0
      %p49 = por %p47, %p48
      %p50 = scmp.ne.s32.totalorder %s36, %s37
      %p51 = scmp.eq.s32.totalorder %s29, 1
      %p52 = por %p50, %p51
      %p54 = scmp.ne.s32.totalorder %s37, %s53
      %p55 = scmp.eq.s32.totalorder %s29, 0
      %p56 = por %p54, %p55
      %s57 = ssub.s32 %s23, %s30
      %p58 = scmp.eq.s32.totalorder %s57, 0
      %s60 = sadd.s32 %s59, 1
      %s61 = scalar_select %p58, %s59, %s60
      %p64 = pneg %p58
      %p65 = scmp.eq.s32.totalorder %s23, 1
      %p66 = por %p64, %p65
      %p67 = scmp.ne.s32.totalorder %s59, %s62
      %p68 = scmp.eq.s32.totalorder %s23, 0
      %p69 = por %p67, %p68
      %p70 = scmp.ne.s32.totalorder %s59, %s62
      %p71 = scmp.eq.s32.totalorder %s28, 1
      %p72 = por %p70, %p71
      %p73 = scmp.ne.s32.totalorder %s62, %s63
      %p74 = scmp.eq.s32.totalorder %s28, 0
      %p75 = por %p73, %p74
      %p76 = scmp.ne.s32.totalorder %s62, %s63
      %p77 = scmp.eq.s32.totalorder %s29, 1
      %p78 = por %p76, %p77
      %p80 = scmp.ne.s32.totalorder %s63, %s79
      %p81 = scmp.eq.s32.totalorder %s29, 0
      %p82 = por %p80, %p81
      %s84 = sadd.s32 %s83, 1
      %p87 = scmp.eq.s32.totalorder %s23, 1
      %p88 = scmp.ne.s32.totalorder %s83, %s85
      %p89 = scmp.eq.s32.totalorder %s23, 0
      %p90 = por %p88, %p89
      %p91 = scmp.ne.s32.totalorder %s83, %s85
      %p92 = scmp.eq.s32.totalorder %s28, 1
      %p93 = por %p91, %p92
      %p94 = scmp.ne.s32.totalorder %s85, %s86
      %p95 = scmp.eq.s32.totalorder %s28, 0
      %p96 = por %p94, %p95
      %p97 = scmp.ne.s32.totalorder %s85, %s86
      %p98 = scmp.eq.s32.totalorder %s29, 1
      %p99 = por %p97, %p98
      %p101 = scmp.ne.s32.totalorder %s86, %s100
      %p102 = scmp.eq.s32.totalorder %s29, 0
      %p103 = por %p101, %p102
      %s105 = sadd.s32 %s104, 1
      %p108 = scmp.eq.s32.totalorder %s23, 1
      %p109 = scmp.ne.s32.totalorder %s104, %s106
      %p110 = scmp.eq.s32.totalorder %s23, 0
      %p111 = por %p109, %p110
      %p112 = scmp.ne.s32.totalorder %s104, %s106
      %p113 = scmp.eq.s32.totalorder %s28, 1
      %p114 = por %p112, %p113
      %p115 = scmp.ne.s32.totalorder %s106, %s107
      %p116 = scmp.eq.s32.totalorder %s28, 0
      %p117 = por %p115, %p116
      %p118 = scmp.ne.s32.totalorder %s106, %s107
      %p119 = scmp.eq.s32.totalorder %s29, 1
      %p120 = por %p118, %p119
      %p122 = scmp.ne.s32.totalorder %s107, %s121
      %p123 = scmp.eq.s32.totalorder %s29, 0
      %p124 = por %p122, %p123
      %s126 = sadd.s32 %s125, 1
      %p129 = scmp.eq.s32.totalorder %s23, 1
      %p130 = scmp.ne.s32.totalorder %s125, %s127
      %p131 = scmp.eq.s32.totalorder %s23, 0
      %p132 = por %p130, %p131
      %p133 = scmp.ne.s32.totalorder %s125, %s127
      %p134 = scmp.eq.s32.totalorder %s28, 1
      %p135 = por %p133, %p134
      %p136 = scmp.ne.s32.totalorder %s127, %s128
      %p137 = scmp.eq.s32.totalorder %s28, 0
      %p138 = por %p136, %p137
      %p139 = scmp.ne.s32.totalorder %s127, %s128
      %p140 = scmp.eq.s32.totalorder %s29, 1
      %p141 = por %p139, %p140
      %p143 = scmp.ne.s32.totalorder %s128, %s142
      %p144 = scmp.eq.s32.totalorder %s29, 0
      %p145 = por %p143, %p144
      %s147 = sadd.s32 %s146, 1
      %p150 = scmp.eq.s32.totalorder %s23, 1
      %p151 = scmp.ne.s32.totalorder %s146, %s148
      %p152 = scmp.eq.s32.totalorder %s23, 0
      %p153 = por %p151, %p152
      %p154 = scmp.ne.s32.totalorder %s146, %s148
      %p155 = scmp.eq.s32.totalorder %s28, 1
      %p156 = por %p154, %p155
      %p157 = scmp.ne.s32.totalorder %s148, %s149
      %p158 = scmp.eq.s32.totalorder %s28, 0
      %p159 = por %p157, %p158
      %p160 = scmp.ne.s32.totalorder %s148, %s149
      %p161 = scmp.eq.s32.totalorder %s29, 1
      %p162 = por %p160, %p161
      %p164 = scmp.ne.s32.totalorder %s149, %s163
      %p165 = scmp.eq.s32.totalorder %s29, 0
      %p166 = por %p164, %p165
      %s168 = sadd.s32 %s167, 1
      %p171 = scmp.eq.s32.totalorder %s23, 1
      %p172 = scmp.ne.s32.totalorder %s167, %s169
      %p173 = scmp.eq.s32.totalorder %s23, 0
      %p174 = por %p172, %p173
      %p175 = scmp.ne.s32.totalorder %s167, %s169
      %p176 = scmp.eq.s32.totalorder %s28, 1
      %p177 = por %p175, %p176
      %p178 = scmp.ne.s32.totalorder %s169, %s170
      %p179 = scmp.eq.s32.totalorder %s28, 0
      %p180 = por %p178, %p179
      %p181 = scmp.ne.s32.totalorder %s169, %s170
      %p182 = scmp.eq.s32.totalorder %s29, 1
      %p183 = por %p181, %p182
      %p185 = scmp.ne.s32.totalorder %s170, %s184
      %p186 = scmp.eq.s32.totalorder %s29, 0
      %p187 = por %p185, %p186
      %s189 = sadd.s32 %s188, 1
      %p192 = scmp.eq.s32.totalorder %s23, 1
      %p193 = scmp.ne.s32.totalorder %s188, %s190
      %p194 = scmp.eq.s32.totalorder %s23, 0
      %p195 = por %p193, %p194
      %p196 = scmp.ne.s32.totalorder %s188, %s190
      %p197 = scmp.eq.s32.totalorder %s28, 1
      %p198 = por %p196, %p197
      %p199 = scmp.ne.s32.totalorder %s190, %s191
      %p200 = scmp.eq.s32.totalorder %s28, 0
      %p201 = por %p199, %p200
      %p202 = scmp.ne.s32.totalorder %s190, %s191
      %p203 = scmp.eq.s32.totalorder %s29, 1
      %p204 = por %p202, %p203
      %p206 = scmp.ne.s32.totalorder %s191, %s205
      %p207 = scmp.eq.s32.totalorder %s29, 0
      %p208 = por %p206, %p207
      %s209 = ssub.s32 %s23, %s30
      %p210 = scmp.eq.s32.totalorder %s209, 0
      %s212 = sadd.s32 %s211, 1
      %s213 = scalar_select %p210, %s211, %s212
      %p216 = pneg %p210
      %p217 = scmp.eq.s32.totalorder %s23, 1
      %p218 = por %p216, %p217
      %p219 = scmp.ne.s32.totalorder %s211, %s214
      %p220 = scmp.eq.s32.totalorder %s23, 0
      %p221 = por %p219, %p220
      %p222 = scmp.ne.s32.totalorder %s211, %s214
      %p223 = scmp.eq.s32.totalorder %s28, 1
      %p224 = por %p222, %p223
      %p225 = scmp.ne.s32.totalorder %s214, %s215
      %p226 = scmp.eq.s32.totalorder %s28, 0
      %p227 = por %p225, %p226
      %p228 = scmp.ne.s32.totalorder %s214, %s215
      %p229 = scmp.eq.s32.totalorder %s29, 1
      %p230 = por %p228, %p229
      %p232 = scmp.ne.s32.totalorder %s215, %s231
      %p233 = scmp.eq.s32.totalorder %s29, 0
      %p234 = por %p232, %p233
      %p235 = scmp.le.s32.totalorder 1, %s23
      %p236 = scmp.lt.s32.totalorder %s23, 3
      %p237 = pnand %p235, %p236
      %p238 = pneg %p237
      // Predicated region
      $region9: #{tpu_custom_call.1} parent=5 // pred_check
        _
      $region10: #{tpu_custom_call.1} parent=5 // pred_check_branch
        %240 = sbr.rel (%p237) target = $region12
      $region11: #{tpu_custom_call.1} parent=5 // pred_region
        %s241 = ssub.s32 %s23, 1
        // Predicated region
        $region13: #{tpu_custom_call.1} parent=11 // pred_check
          %p242 = pneg %p96
        $region14: #{tpu_custom_call.1} parent=11 // pred_check_branch
          %244 = sbr.rel (%p242) target = $region16
        $region15: #{tpu_custom_call.1} parent=11 // pred_region
          _
        $region16: #{tpu_custom_call.1} parent=11 // pred_fallthru
          _
        // Predicated region
        $region17: #{tpu_custom_call.1} parent=11 // pred_check
          %p245 = pneg %p117
        $region18: #{tpu_custom_call.1} parent=11 // pred_check_branch
          %247 = sbr.rel (%p245) target = $region20
        $region19: #{tpu_custom_call.1} parent=11 // pred_region
          _
        $region20: #{tpu_custom_call.1} parent=11 // pred_fallthru
          _
        // Predicated region
        $region21: #{tpu_custom_call.1} parent=11 // pred_check
          %p248 = pneg %p138
        $region22: #{tpu_custom_call.1} parent=11 // pred_check_branch
          %250 = sbr.rel (%p248) target = $region24
        $region23: #{tpu_custom_call.1} parent=11 // pred_region
          _
        $region24: #{tpu_custom_call.1} parent=11 // pred_fallthru
          _
        // Predicated region
        $region25: #{tpu_custom_call.1} parent=11 // pred_check
          %p251 = pneg %p159
        $region26: #{tpu_custom_call.1} parent=11 // pred_check_branch
          %253 = sbr.rel (%p251) target = $region28
        $region27: #{tpu_custom_call.1} parent=11 // pred_region
          _
        $region28: #{tpu_custom_call.1} parent=11 // pred_fallthru
          _
        // Predicated region
        $region29: #{tpu_custom_call.1} parent=11 // pred_check
          %p254 = pneg %p180
        $region30: #{tpu_custom_call.1} parent=11 // pred_check_branch
          %256 = sbr.rel (%p254) target = $region32
        $region31: #{tpu_custom_call.1} parent=11 // pred_region
          _
        $region32: #{tpu_custom_call.1} parent=11 // pred_fallthru
          _
        // Predicated region
        $region33: #{tpu_custom_call.1} parent=11 // pred_check
          %p257 = pneg %p201
        $region34: #{tpu_custom_call.1} parent=11 // pred_check_branch
          %259 = sbr.rel (%p257) target = $region36
        $region35: #{tpu_custom_call.1} parent=11 // pred_region
          _
        $region36: #{tpu_custom_call.1} parent=11 // pred_fallthru
          _
      $region12: #{tpu_custom_call.1} parent=5 // pred_fallthru
        _
      %p260 = scmp.lt.s32.totalorder %s23, 2
      // Predicated region
      $region37: #{tpu_custom_call.1} parent=5 // pred_check
        %p261 = pneg %p260
      $region38: #{tpu_custom_call.1} parent=5 // pred_check_branch
        %263 = sbr.rel (%p261) target = $region40
      $region39: #{tpu_custom_call.1} parent=5 // pred_region
        // Predicated region
        $region41: #{tpu_custom_call.1} parent=39 // pred_check
          %p264 = pneg %p43
        $region42: #{tpu_custom_call.1} parent=39 // pred_check_branch
          %266 = sbr.rel (%p264) target = $region44
        $region43: #{tpu_custom_call.1} parent=39 // pred_region
          %s267 = sand.u32 %s33, 1
          %s268 = scalar_lea.sflag [#allocation3], %s267
          %s269 = sand.u32 %s33, 1
          %s270 = smul.addr %s269, 64
          %s271 = scalar_lea.vmem [#allocation2], %s270
          %s272 = smul.u32 8, %s23
          %s274 = ssub.s32 1024, 1024
          %275 = vsyncadd %s268, %s274
          %s276 = smul.addr %s272, 2
          %s277 = smul.addr %s276, 64
          %s278 = scalar_lea.hbm %s0, %s277
          %s279 = sshll.u32 %s271, 4
          %s280 = int_to_ptr.vmem [resolvable:$true] %s279
          %285 = dma.hbm_to_vmem [thread:$0]  %s278, 1024, %s280, %s268, 64, 64, 4
        $region44: #{tpu_custom_call.1} parent=39 // pred_fallthru
          _
        // Predicated region
        $region45: #{tpu_custom_call.1} parent=39 // pred_check
          %p286 = pneg %p69
        $region46: #{tpu_custom_call.1} parent=39 // pred_check_branch
          %288 = sbr.rel (%p286) target = $region48
        $region47: #{tpu_custom_call.1} parent=39 // pred_region
          %s289 = sand.u32 %s59, 1
          %s290 = scalar_lea.sflag [#allocation6], %s289
          %s291 = sand.u32 %s59, 1
          %s292 = smul.addr %s291, 128
          %s293 = scalar_lea.vmem [#allocation5], %s292
          %s294 = smul.u32 8, %s23
          %s296 = ssub.s32 2048, 2048
          %297 = vsyncadd %s290, %s296
          %s298 = smul.addr %s294, 2
          %s299 = smul.addr %s298, 128
          %s300 = scalar_lea.hbm %s1, %s299
          %s301 = sshll.u32 %s293, 4
          %s302 = int_to_ptr.vmem [resolvable:$true] %s301
          %307 = dma.hbm_to_vmem [thread:$0]  %s300, 2048, %s302, %s290, 128, 128, 8
        $region48: #{tpu_custom_call.1} parent=39 // pred_fallthru
          _
      $region40: #{tpu_custom_call.1} parent=5 // pred_fallthru
        _
      %p308 = scmp.le.s32.totalorder 1, %s23
      %p309 = scmp.lt.s32.totalorder %s23, 3
      %p310 = pnand %p308, %p309
      %p311 = pneg %p310
      // Predicated region
      $region49: #{tpu_custom_call.1} parent=5 // pred_check
        _
      $region50: #{tpu_custom_call.1} parent=5 // pred_check_branch
        %313 = sbr.rel (%p310) target = $region52
      $region51: #{tpu_custom_call.1} parent=5 // pred_region
        %s314 = ssub.s32 %s23, 1
        %s315 = sand.u32 %s36, 1
        %s316 = scalar_lea.sflag [#allocation3], %s315
        %s317 = sand.u32 %s36, 1
        %s318 = smul.addr %s317, 64
        %s319 = scalar_lea.vmem [#allocation2], %s318
        // Predicated region
        $region53: #{tpu_custom_call.1} parent=51 // pred_check
          %p320 = pneg %p49
        $region54: #{tpu_custom_call.1} parent=51 // pred_check_branch
          %322 = sbr.rel (%p320) target = $region56
        $region55: #{tpu_custom_call.1} parent=51 // pred_region
          %323 = dma.done %s316, 1024
        $region56: #{tpu_custom_call.1} parent=51 // pred_fallthru
          _
        %s324 = sand.u32 %s62, 1
        %s325 = scalar_lea.sflag [#allocation6], %s324
        %s326 = sand.u32 %s62, 1
        %s327 = smul.addr %s326, 128
        %s328 = scalar_lea.vmem [#allocation5], %s327
        // Predicated region
        $region57: #{tpu_custom_call.1} parent=51 // pred_check
          %p329 = pneg %p75
        $region58: #{tpu_custom_call.1} parent=51 // pred_check_branch
          %331 = sbr.rel (%p329) target = $region60
        $region59: #{tpu_custom_call.1} parent=51 // pred_region
          %332 = dma.done %s325, 2048
        $region60: #{tpu_custom_call.1} parent=51 // pred_fallthru
          _
        %s333 = sand.u32 %s36, 1
        %s334 = scalar_lea.sflag [#allocation3], %s333
        %s335 = sand.u32 %s36, 1
        %s336 = smul.addr %s335, 64
        %s337 = scalar_lea.vmem [#allocation2], %s336
        %p338 = pneg %p49
        %p339 = pneg %p46
        %s340 = sand.u32 %s62, 1
        %s341 = scalar_lea.sflag [#allocation6], %s340
        %s342 = sand.u32 %s62, 1
        %s343 = smul.addr %s342, 128
        %s344 = scalar_lea.vmem [#allocation5], %s343
        %p345 = pneg %p75
        %p346 = pneg %p72
        %p347 = pneg %p96
        %p348 = pneg %p93
        %p349 = pneg %p117
        %p350 = pneg %p114
        %p351 = pneg %p138
        %p352 = pneg %p135
        %p353 = pneg %p159
        %p354 = pneg %p156
        %p355 = pneg %p180
        %p356 = pneg %p177
        %p357 = pneg %p201
        %p358 = pneg %p198
        %p359 = pneg %p227
        %p360 = pneg %p224
        %s361 = sand.u32 %s214, 1
        %s362 = scalar_lea.sflag [#allocation4], %s361
        %s363 = sand.u32 %s214, 1
        %s364 = smul.addr %s363, 128
        %s365 = scalar_lea.vmem [#allocation7], %s364
        %s366 = smul.u32 8, %s28
        %s367 = smul.u32 8, %s28
        %s368 = smul.u32 16, %s28
        %v370 = vld [vmem:[%s319] sm:$0xf]
        %v371 = vld [vmem:[%s319 + $0x4] sm:$0xf]
        %v372 = vld [vmem:[%s319 + $0x8] sm:$0xf]
        %v373 = vld [vmem:[%s319 + $0xc] sm:$0xf]
        %v374 = vld [vmem:[%s319 + $0x10] sm:$0xf]
        %v375 = vld [vmem:[%s319 + $0x14] sm:$0xf]
        %v376 = vld [vmem:[%s319 + $0x18] sm:$0xf]
        %v377 = vld [vmem:[%s319 + $0x1c] sm:$0xf]
        %v378 = vld [vmem:[%s319 + $0x20] sm:$0xf]
        %v379 = vld [vmem:[%s319 + $0x24] sm:$0xf]
        %v380 = vld [vmem:[%s319 + $0x28] sm:$0xf]
        %v381 = vld [vmem:[%s319 + $0x2c] sm:$0xf]
        %v382 = vld [vmem:[%s319 + $0x30] sm:$0xf]
        %v383 = vld [vmem:[%s319 + $0x34] sm:$0xf]
        %v384 = vld [vmem:[%s319 + $0x38] sm:$0xf]
        %v385 = vld [vmem:[%s319 + $0x3c] sm:$0xf]
        %v386 = vld [vmem:[%s328] sm:$0xff]
        %v387 = vld [vmem:[%s328 + $0x8] sm:$0xff]
        %v388 = vld [vmem:[%s328 + $0x10] sm:$0xff]
        %v389 = vld [vmem:[%s328 + $0x18] sm:$0xff]
        %v390 = vld [vmem:[%s328 + $0x20] sm:$0xff]
        %v391 = vld [vmem:[%s328 + $0x28] sm:$0xff]
        %v392 = vld [vmem:[%s328 + $0x30] sm:$0xff]
        %v393 = vld [vmem:[%s328 + $0x38] sm:$0xff]
        %v394 = vld [vmem:[%s328 + $0x40] sm:$0xff]
        %v395 = vld [vmem:[%s328 + $0x48] sm:$0xff]
        %v396 = vld [vmem:[%s328 + $0x50] sm:$0xff]
        %v397 = vld [vmem:[%s328 + $0x58] sm:$0xff]
        %v398 = vld [vmem:[%s328 + $0x60] sm:$0xff]
        %v399 = vld [vmem:[%s328 + $0x68] sm:$0xff]
        %v400 = vld [vmem:[%s328 + $0x70] sm:$0xff]
        %v401 = vld [vmem:[%s328 + $0x78] sm:$0xff]
        %v402 = vunpack.c.l.bf16 %v370
        %v403 = vunpack.c.l.bf16 %v371
        %v404 = vunpack.c.l.bf16 %v372
        %v405 = vunpack.c.l.bf16 %v373
        %v406 = vunpack.c.l.bf16 %v374
        %v407 = vunpack.c.l.bf16 %v375
        %v408 = vunpack.c.l.bf16 %v376
        %v409 = vunpack.c.l.bf16 %v377
        %v410 = vunpack.c.l.bf16 %v378
        %v411 = vunpack.c.l.bf16 %v379
        %v412 = vunpack.c.l.bf16 %v380
        %v413 = vunpack.c.l.bf16 %v381
        %v414 = vunpack.c.l.bf16 %v382
        %v415 = vunpack.c.l.bf16 %v383
        %v416 = vunpack.c.l.bf16 %v384
        %v417 = vunpack.c.l.bf16 %v385
        %vm418 = vcmask 130048
        %v419 = vsel %vm418, %v402, 0.0
        %420 = vadd.xlane.f32.xlu0 %v419
        %v421 = vpop.xlane.xlu0 %420
        %v422 = vsel %vm418, %v403, 0.0
        %423 = vadd.xlane.f32.xlu0 %v422
        %v424 = vpop.xlane.xlu0 %423
        %v425 = vsel %vm418, %v404, 0.0
        %426 = vadd.xlane.f32.xlu0 %v425
        %v427 = vpop.xlane.xlu0 %426
        %v428 = vsel %vm418, %v405, 0.0
        %429 = vadd.xlane.f32.xlu0 %v428
        %v430 = vpop.xlane.xlu0 %429
        %v431 = vsel %vm418, %v406, 0.0
        %432 = vadd.xlane.f32.xlu0 %v431
        %v433 = vpop.xlane.xlu0 %432
        %v434 = vsel %vm418, %v407, 0.0
        %435 = vadd.xlane.f32.xlu0 %v434
        %v436 = vpop.xlane.xlu0 %435
        %v437 = vsel %vm418, %v408, 0.0
        %438 = vadd.xlane.f32.xlu0 %v437
        %v439 = vpop.xlane.xlu0 %438
        %v440 = vsel %vm418, %v409, 0.0
        %441 = vadd.xlane.f32.xlu0 %v440
        %v442 = vpop.xlane.xlu0 %441
        %v443 = vsel %vm418, %v410, 0.0
        %444 = vadd.xlane.f32.xlu0 %v443
        %v445 = vpop.xlane.xlu0 %444
        %v446 = vsel %vm418, %v411, 0.0
        %447 = vadd.xlane.f32.xlu0 %v446
        %v448 = vpop.xlane.xlu0 %447
        %v449 = vsel %vm418, %v412, 0.0
        %450 = vadd.xlane.f32.xlu0 %v449
        %v451 = vpop.xlane.xlu0 %450
        %v452 = vsel %vm418, %v413, 0.0
        %453 = vadd.xlane.f32.xlu0 %v452
        %v454 = vpop.xlane.xlu0 %453
        %v455 = vsel %vm418, %v414, 0.0
        %456 = vadd.xlane.f32.xlu0 %v455
        %v457 = vpop.xlane.xlu0 %456
        %v458 = vsel %vm418, %v415, 0.0
        %459 = vadd.xlane.f32.xlu0 %v458
        %v460 = vpop.xlane.xlu0 %459
        %v461 = vsel %vm418, %v416, 0.0
        %462 = vadd.xlane.f32.xlu0 %v461
        %v463 = vpop.xlane.xlu0 %462
        %v464 = vsel %vm418, %v417, 0.0
        %465 = vadd.xlane.f32.xlu0 %v464
        %v466 = vpop.xlane.xlu0 %465
        %v467 = vadd.f32 %v421, 1.0
        %v468 = vadd.f32 %v424, 1.0
        %v469 = vadd.f32 %v427, 1.0
        %v470 = vadd.f32 %v430, 1.0
        %v471 = vadd.f32 %v433, 1.0
        %v472 = vadd.f32 %v436, 1.0
        %v473 = vadd.f32 %v439, 1.0
        %v474 = vadd.f32 %v442, 1.0
        %v475 = vadd.f32 %v445, 1.0
        %v476 = vadd.f32 %v448, 1.0
        %v477 = vadd.f32 %v451, 1.0
        %v478 = vadd.f32 %v454, 1.0
        %v479 = vadd.f32 %v457, 1.0
        %v480 = vadd.f32 %v460, 1.0
        %v481 = vadd.f32 %v463, 1.0
        %v482 = vadd.f32 %v466, 1.0
        %v483 = vrcp.pop %v467
        %v484 = vrcp.pop %v468
        %v485 = vrcp.pop %v469
        %v486 = vrcp.pop %v470
        %v487 = vrcp.pop %v471
        %v488 = vrcp.pop %v472
        %v489 = vrcp.pop %v473
        %v490 = vrcp.pop %v474
        %v491 = vrcp.pop %v475
        %v492 = vrcp.pop %v476
        %v493 = vrcp.pop %v477
        %v494 = vrcp.pop %v478
        %v495 = vrcp.pop %v479
        %v496 = vrcp.pop %v480
        %v497 = vrcp.pop %v481
        %v498 = vrcp.pop %v482
        %v499 = vpack.c.bf16 %v387, %v386
        %v500 = vpack.c.bf16 %v389, %v388
        %v501 = vpack.c.bf16 %v391, %v390
        %v502 = vpack.c.bf16 %v393, %v392
        %v503 = vpack.c.bf16 %v395, %v394
        %v504 = vpack.c.bf16 %v397, %v396
        %v505 = vpack.c.bf16 %v399, %v398
        %v506 = vpack.c.bf16 %v401, %v400
        %v509 = vunpack.c.l.b16 %v370
        %v510 = vunpack.c.l.b16 %v371
        %v511 = vpack.c.b16 %v510, %v509
        %v513 = vsel %vm418, %v511, 0
        %515 = vmatprep.subr.bf16.mxu0 0
        %516 = vmatpush1.bf16.msra.mxu0 %v499
        %517 = vmatprep.subr.bf16.mxu0 0
        %518 = vmatpush1.bf16.msra.mxu0 0
        %519 = vmatprep.subr.bf16.mxu0 0
        %520 = vmatpush1.bf16.msra.mxu0 0
        %521 = vmatprep.subr.bf16.mxu0 0
        %522 = vmatpush1.bf16.msra.mxu0 0
        %523 = vmatprep.subr.bf16.mxu0 0
        %524 = vmatpush1.bf16.msra.mxu0 0
        %525 = vmatprep.subr.bf16.mxu0 0
        %526 = vmatpush1.bf16.msra.mxu0 0
        %527 = vmatprep.subr.bf16.mxu0 0
        %528 = vmatpush1.bf16.msra.mxu0 0
        %529 = vmatprep.subr.bf16.mxu0 0
        %530 = vmatpush1.bf16.msra.mxu0 0
        %531 = vmatprep.subr.bf16.mxu0 0
        %532 = vmatpush1.bf16.msra.mxu0 0
        %533 = vmatprep.subr.bf16.mxu0 0
        %534 = vmatpush1.bf16.msra.mxu0 0
        %535 = vmatprep.subr.bf16.mxu0 0
        %536 = vmatpush1.bf16.msra.mxu0 0
        %537 = vmatprep.subr.bf16.mxu0 0
        %538 = vmatpush1.bf16.msra.mxu0 0
        %539 = vmatprep.subr.bf16.mxu0 0
        %540 = vmatpush1.bf16.msra.mxu0 0
        %541 = vmatprep.subr.bf16.mxu0 0
        %542 = vmatpush1.bf16.msra.mxu0 0
        %543 = vmatprep.subr.bf16.mxu0 0
        %544 = vmatpush1.bf16.msra.mxu0 0
        %545 = vmatprep.subr.bf16.mxu0 0
        %546 = vmatpush1.bf16.msra.mxu0 0
        %547 = vmatprep.mubr.bf16.mxu0 0
        %548 = vmatmul.mubr.bf16.gmra.mrb[0].mxu0 %v513
        %v549 = vpop.f32.mrb[0].mxu0
        %v550 = vadd.f32 0.0, %v549
        %v551 = vpop.f32.mrb[0].mxu0
        %v552 = vpop.f32.mrb[0].mxu0
        %v553 = vadd.f32 0.0, %v552
        %v554 = vpop.f32.mrb[0].mxu0
        %555 = vdwg.mxu0
        %v558 = vunpack.c.l.b16 %v372
        %v559 = vunpack.c.l.b16 %v373
        %v560 = vpack.c.b16 %v559, %v558
        %v562 = vsel %vm418, %v560, 0
        %564 = vmatprep.subr.bf16.mxu0 0
        %565 = vmatpush1.bf16.msra.mxu0 %v500
        %566 = vmatprep.subr.bf16.mxu0 0
        %567 = vmatpush1.bf16.msra.mxu0 0
        %568 = vmatprep.subr.bf16.mxu0 0
        %569 = vmatpush1.bf16.msra.mxu0 0
        %570 = vmatprep.subr.bf16.mxu0 0
        %571 = vmatpush1.bf16.msra.mxu0 0
        %572 = vmatprep.subr.bf16.mxu0 0
        %573 = vmatpush1.bf16.msra.mxu0 0
        %574 = vmatprep.subr.bf16.mxu0 0
        %575 = vmatpush1.bf16.msra.mxu0 0
        %576 = vmatprep.subr.bf16.mxu0 0
        %577 = vmatpush1.bf16.msra.mxu0 0
        %578 = vmatprep.subr.bf16.mxu0 0
        %579 = vmatpush1.bf16.msra.mxu0 0
        %580 = vmatprep.subr.bf16.mxu0 0
        %581 = vmatpush1.bf16.msra.mxu0 0
        %582 = vmatprep.subr.bf16.mxu0 0
        %583 = vmatpush1.bf16.msra.mxu0 0
        %584 = vmatprep.subr.bf16.mxu0 0
        %585 = vmatpush1.bf16.msra.mxu0 0
        %586 = vmatprep.subr.bf16.mxu0 0
        %587 = vmatpush1.bf16.msra.mxu0 0
        %588 = vmatprep.subr.bf16.mxu0 0
        %589 = vmatpush1.bf16.msra.mxu0 0
        %590 = vmatprep.subr.bf16.mxu0 0
        %591 = vmatpush1.bf16.msra.mxu0 0
        %592 = vmatprep.subr.bf16.mxu0 0
        %593 = vmatpush1.bf16.msra.mxu0 0
        %594 = vmatprep.subr.bf16.mxu0 0
        %595 = vmatpush1.bf16.msra.mxu0 0
        %596 = vmatprep.mubr.bf16.mxu0 0
        %597 = vmatmul.mubr.bf16.gmra.mrb[0].mxu0 %v562
        %v598 = vpop.f32.mrb[0].mxu0
        %v599 = vadd.f32 0.0, %v598
        %v600 = vpop.f32.mrb[0].mxu0
        %v601 = vpop.f32.mrb[0].mxu0
        %v602 = vadd.f32 0.0, %v601
        %v603 = vpop.f32.mrb[0].mxu0
        %604 = vdwg.mxu0
        %v607 = vunpack.c.l.b16 %v374
        %v608 = vunpack.c.l.b16 %v375
        %v609 = vpack.c.b16 %v608, %v607
        %v611 = vsel %vm418, %v609, 0
        %613 = vmatprep.subr.bf16.mxu0 0
        %614 = vmatpush1.bf16.msra.mxu0 %v501
        %615 = vmatprep.subr.bf16.mxu0 0
        %616 = vmatpush1.bf16.msra.mxu0 0
        %617 = vmatprep.subr.bf16.mxu0 0
        %618 = vmatpush1.bf16.msra.mxu0 0
        %619 = vmatprep.subr.bf16.mxu0 0
        %620 = vmatpush1.bf16.msra.mxu0 0
        %621 = vmatprep.subr.bf16.mxu0 0
        %622 = vmatpush1.bf16.msra.mxu0 0
        %623 = vmatprep.subr.bf16.mxu0 0
        %624 = vmatpush1.bf16.msra.mxu0 0
        %625 = vmatprep.subr.bf16.mxu0 0
        %626 = vmatpush1.bf16.msra.mxu0 0
        %627 = vmatprep.subr.bf16.mxu0 0
        %628 = vmatpush1.bf16.msra.mxu0 0
        %629 = vmatprep.subr.bf16.mxu0 0
        %630 = vmatpush1.bf16.msra.mxu0 0
        %631 = vmatprep.subr.bf16.mxu0 0
        %632 = vmatpush1.bf16.msra.mxu0 0
        %633 = vmatprep.subr.bf16.mxu0 0
        %634 = vmatpush1.bf16.msra.mxu0 0
        %635 = vmatprep.subr.bf16.mxu0 0
        %636 = vmatpush1.bf16.msra.mxu0 0
        %637 = vmatprep.subr.bf16.mxu0 0
        %638 = vmatpush1.bf16.msra.mxu0 0
        %639 = vmatprep.subr.bf16.mxu0 0
        %640 = vmatpush1.bf16.msra.mxu0 0
        %641 = vmatprep.subr.bf16.mxu0 0
        %642 = vmatpush1.bf16.msra.mxu0 0
        %643 = vmatprep.subr.bf16.mxu0 0
        %644 = vmatpush1.bf16.msra.mxu0 0
        %645 = vmatprep.mubr.bf16.mxu0 0
        %646 = vmatmul.mubr.bf16.gmra.mrb[0].mxu0 %v611
        %v647 = vpop.f32.mrb[0].mxu0
        %v648 = vadd.f32 0.0, %v647
        %v649 = vpop.f32.mrb[0].mxu0
        %v650 = vpop.f32.mrb[0].mxu0
        %v651 = vadd.f32 0.0, %v650
        %v652 = vpop.f32.mrb[0].mxu0
        %653 = vdwg.mxu0
        %v656 = vunpack.c.l.b16 %v376
        %v657 = vunpack.c.l.b16 %v377
        %v658 = vpack.c.b16 %v657, %v656
        %v660 = vsel %vm418, %v658, 0
        %662 = vmatprep.subr.bf16.mxu0 0
        %663 = vmatpush1.bf16.msra.mxu0 %v502
        %664 = vmatprep.subr.bf16.mxu0 0
        %665 = vmatpush1.bf16.msra.mxu0 0
        %666 = vmatprep.subr.bf16.mxu0 0
        %667 = vmatpush1.bf16.msra.mxu0 0
        %668 = vmatprep.subr.bf16.mxu0 0
        %669 = vmatpush1.bf16.msra.mxu0 0
        %670 = vmatprep.subr.bf16.mxu0 0
        %671 = vmatpush1.bf16.msra.mxu0 0
        %672 = vmatprep.subr.bf16.mxu0 0
        %673 = vmatpush1.bf16.msra.mxu0 0
        %674 = vmatprep.subr.bf16.mxu0 0
        %675 = vmatpush1.bf16.msra.mxu0 0
        %676 = vmatprep.subr.bf16.mxu0 0
        %677 = vmatpush1.bf16.msra.mxu0 0
        %678 = vmatprep.subr.bf16.mxu0 0
        %679 = vmatpush1.bf16.msra.mxu0 0
        %680 = vmatprep.subr.bf16.mxu0 0
        %681 = vmatpush1.bf16.msra.mxu0 0
        %682 = vmatprep.subr.bf16.mxu0 0
        %683 = vmatpush1.bf16.msra.mxu0 0
        %684 = vmatprep.subr.bf16.mxu0 0
        %685 = vmatpush1.bf16.msra.mxu0 0
        %686 = vmatprep.subr.bf16.mxu0 0
        %687 = vmatpush1.bf16.msra.mxu0 0
        %688 = vmatprep.subr.bf16.mxu0 0
        %689 = vmatpush1.bf16.msra.mxu0 0
        %690 = vmatprep.subr.bf16.mxu0 0
        %691 = vmatpush1.bf16.msra.mxu0 0
        %692 = vmatprep.subr.bf16.mxu0 0
        %693 = vmatpush1.bf16.msra.mxu0 0
        %694 = vmatprep.mubr.bf16.mxu0 0
        %695 = vmatmul.mubr.bf16.gmra.mrb[0].mxu0 %v660
        %v696 = vpop.f32.mrb[0].mxu0
        %v697 = vadd.f32 0.0, %v696
        %v698 = vpop.f32.mrb[0].mxu0
        %v699 = vpop.f32.mrb[0].mxu0
        %v700 = vadd.f32 0.0, %v699
        %v701 = vpop.f32.mrb[0].mxu0
        %702 = vdwg.mxu0
        %v705 = vunpack.c.l.b16 %v378
        %v706 = vunpack.c.l.b16 %v379
        %v707 = vpack.c.b16 %v706, %v705
        %v709 = vsel %vm418, %v707, 0
        %711 = vmatprep.subr.bf16.mxu0 0
        %712 = vmatpush1.bf16.msra.mxu0 %v503
        %713 = vmatprep.subr.bf16.mxu0 0
        %714 = vmatpush1.bf16.msra.mxu0 0
        %715 = vmatprep.subr.bf16.mxu0 0
        %716 = vmatpush1.bf16.msra.mxu0 0
        %717 = vmatprep.subr.bf16.mxu0 0
        %718 = vmatpush1.bf16.msra.mxu0 0
        %719 = vmatprep.subr.bf16.mxu0 0
        %720 = vmatpush1.bf16.msra.mxu0 0
        %721 = vmatprep.subr.bf16.mxu0 0
        %722 = vmatpush1.bf16.msra.mxu0 0
        %723 = vmatprep.subr.bf16.mxu0 0
        %724 = vmatpush1.bf16.msra.mxu0 0
        %725 = vmatprep.subr.bf16.mxu0 0
        %726 = vmatpush1.bf16.msra.mxu0 0
        %727 = vmatprep.subr.bf16.mxu0 0
        %728 = vmatpush1.bf16.msra.mxu0 0
        %729 = vmatprep.subr.bf16.mxu0 0
        %730 = vmatpush1.bf16.msra.mxu0 0
        %731 = vmatprep.subr.bf16.mxu0 0
        %732 = vmatpush1.bf16.msra.mxu0 0
        %733 = vmatprep.subr.bf16.mxu0 0
        %734 = vmatpush1.bf16.msra.mxu0 0
        %735 = vmatprep.subr.bf16.mxu0 0
        %736 = vmatpush1.bf16.msra.mxu0 0
        %737 = vmatprep.subr.bf16.mxu0 0
        %738 = vmatpush1.bf16.msra.mxu0 0
        %739 = vmatprep.subr.bf16.mxu0 0
        %740 = vmatpush1.bf16.msra.mxu0 0
        %741 = vmatprep.subr.bf16.mxu0 0
        %742 = vmatpush1.bf16.msra.mxu0 0
        %743 = vmatprep.mubr.bf16.mxu0 0
        %744 = vmatmul.mubr.bf16.gmra.mrb[0].mxu0 %v709
        %v745 = vpop.f32.mrb[0].mxu0
        %v746 = vadd.f32 0.0, %v745
        %v747 = vpop.f32.mrb[0].mxu0
        %v748 = vpop.f32.mrb[0].mxu0
        %v749 = vadd.f32 0.0, %v748
        %v750 = vpop.f32.mrb[0].mxu0
        %751 = vdwg.mxu0
        %v754 = vunpack.c.l.b16 %v380
        %v755 = vunpack.c.l.b16 %v381
        %v756 = vpack.c.b16 %v755, %v754
        %v758 = vsel %vm418, %v756, 0
        %760 = vmatprep.subr.bf16.mxu0 0
        %761 = vmatpush1.bf16.msra.mxu0 %v504
        %762 = vmatprep.subr.bf16.mxu0 0
        %763 = vmatpush1.bf16.msra.mxu0 0
        %764 = vmatprep.subr.bf16.mxu0 0
        %765 = vmatpush1.bf16.msra.mxu0 0
        %766 = vmatprep.subr.bf16.mxu0 0
        %767 = vmatpush1.bf16.msra.mxu0 0
        %768 = vmatprep.subr.bf16.mxu0 0
        %769 = vmatpush1.bf16.msra.mxu0 0
        %770 = vmatprep.subr.bf16.mxu0 0
        %771 = vmatpush1.bf16.msra.mxu0 0
        %772 = vmatprep.subr.bf16.mxu0 0
        %773 = vmatpush1.bf16.msra.mxu0 0
        %774 = vmatprep.subr.bf16.mxu0 0
        %775 = vmatpush1.bf16.msra.mxu0 0
        %776 = vmatprep.subr.bf16.mxu0 0
        %777 = vmatpush1.bf16.msra.mxu0 0
        %778 = vmatprep.subr.bf16.mxu0 0
        %779 = vmatpush1.bf16.msra.mxu0 0
        %780 = vmatprep.subr.bf16.mxu0 0
        %781 = vmatpush1.bf16.msra.mxu0 0
        %782 = vmatprep.subr.bf16.mxu0 0
        %783 = vmatpush1.bf16.msra.mxu0 0
        %784 = vmatprep.subr.bf16.mxu0 0
        %785 = vmatpush1.bf16.msra.mxu0 0
        %786 = vmatprep.subr.bf16.mxu0 0
        %787 = vmatpush1.bf16.msra.mxu0 0
        %788 = vmatprep.subr.bf16.mxu0 0
        %789 = vmatpush1.bf16.msra.mxu0 0
        %790 = vmatprep.subr.bf16.mxu0 0
        %791 = vmatpush1.bf16.msra.mxu0 0
        %792 = vmatprep.mubr.bf16.mxu0 0
        %793 = vmatmul.mubr.bf16.gmra.mrb[0].mxu0 %v758
        %v794 = vpop.f32.mrb[0].mxu0
        %v795 = vadd.f32 0.0, %v794
        %v796 = vpop.f32.mrb[0].mxu0
        %v797 = vpop.f32.mrb[0].mxu0
        %v798 = vadd.f32 0.0, %v797
        %v799 = vpop.f32.mrb[0].mxu0
        %800 = vdwg.mxu0
        %v803 = vunpack.c.l.b16 %v382
        %v804 = vunpack.c.l.b16 %v383
        %v805 = vpack.c.b16 %v804, %v803
        %v807 = vsel %vm418, %v805, 0
        %809 = vmatprep.subr.bf16.mxu0 0
        %810 = vmatpush1.bf16.msra.mxu0 %v505
        %811 = vmatprep.subr.bf16.mxu0 0
        %812 = vmatpush1.bf16.msra.mxu0 0
        %813 = vmatprep.subr.bf16.mxu0 0
        %814 = vmatpush1.bf16.msra.mxu0 0
        %815 = vmatprep.subr.bf16.mxu0 0
        %816 = vmatpush1.bf16.msra.mxu0 0
        %817 = vmatprep.subr.bf16.mxu0 0
        %818 = vmatpush1.bf16.msra.mxu0 0
        %819 = vmatprep.subr.bf16.mxu0 0
        %820 = vmatpush1.bf16.msra.mxu0 0
        %821 = vmatprep.subr.bf16.mxu0 0
        %822 = vmatpush1.bf16.msra.mxu0 0
        %823 = vmatprep.subr.bf16.mxu0 0
        %824 = vmatpush1.bf16.msra.mxu0 0
        %825 = vmatprep.subr.bf16.mxu0 0
        %826 = vmatpush1.bf16.msra.mxu0 0
        %827 = vmatprep.subr.bf16.mxu0 0
        %828 = vmatpush1.bf16.msra.mxu0 0
        %829 = vmatprep.subr.bf16.mxu0 0
        %830 = vmatpush1.bf16.msra.mxu0 0
        %831 = vmatprep.subr.bf16.mxu0 0
        %832 = vmatpush1.bf16.msra.mxu0 0
        %833 = vmatprep.subr.bf16.mxu0 0
        %834 = vmatpush1.bf16.msra.mxu0 0
        %835 = vmatprep.subr.bf16.mxu0 0
        %836 = vmatpush1.bf16.msra.mxu0 0
        %837 = vmatprep.subr.bf16.mxu0 0
        %838 = vmatpush1.bf16.msra.mxu0 0
        %839 = vmatprep.subr.bf16.mxu0 0
        %840 = vmatpush1.bf16.msra.mxu0 0
        %841 = vmatprep.mubr.bf16.mxu0 0
        %842 = vmatmul.mubr.bf16.gmra.mrb[0].mxu0 %v807
        %v843 = vpop.f32.mrb[0].mxu0
        %v844 = vadd.f32 0.0, %v843
        %v845 = vpop.f32.mrb[0].mxu0
        %v846 = vpop.f32.mrb[0].mxu0
        %v847 = vadd.f32 0.0, %v846
        %v848 = vpop.f32.mrb[0].mxu0
        %849 = vdwg.mxu0
        %v852 = vunpack.c.l.b16 %v384
        %v853 = vunpack.c.l.b16 %v385
        %v854 = vpack.c.b16 %v853, %v852
        %v856 = vsel %vm418, %v854, 0
        %858 = vmatprep.subr.bf16.mxu0 0
        %859 = vmatpush1.bf16.msra.mxu0 %v506
        %860 = vmatprep.subr.bf16.mxu0 0
        %861 = vmatpush1.bf16.msra.mxu0 0
        %862 = vmatprep.subr.bf16.mxu0 0
        %863 = vmatpush1.bf16.msra.mxu0 0
        %864 = vmatprep.subr.bf16.mxu0 0
        %865 = vmatpush1.bf16.msra.mxu0 0
        %866 = vmatprep.subr.bf16.mxu0 0
        %867 = vmatpush1.bf16.msra.mxu0 0
        %868 = vmatprep.subr.bf16.mxu0 0
        %869 = vmatpush1.bf16.msra.mxu0 0
        %870 = vmatprep.subr.bf16.mxu0 0
        %871 = vmatpush1.bf16.msra.mxu0 0
        %872 = vmatprep.subr.bf16.mxu0 0
        %873 = vmatpush1.bf16.msra.mxu0 0
        %874 = vmatprep.subr.bf16.mxu0 0
        %875 = vmatpush1.bf16.msra.mxu0 0
        %876 = vmatprep.subr.bf16.mxu0 0
        %877 = vmatpush1.bf16.msra.mxu0 0
        %878 = vmatprep.subr.bf16.mxu0 0
        %879 = vmatpush1.bf16.msra.mxu0 0
        %880 = vmatprep.subr.bf16.mxu0 0
        %881 = vmatpush1.bf16.msra.mxu0 0
        %882 = vmatprep.subr.bf16.mxu0 0
        %883 = vmatpush1.bf16.msra.mxu0 0
        %884 = vmatprep.subr.bf16.mxu0 0
        %885 = vmatpush1.bf16.msra.mxu0 0
        %886 = vmatprep.subr.bf16.mxu0 0
        %887 = vmatpush1.bf16.msra.mxu0 0
        %888 = vmatprep.subr.bf16.mxu0 0
        %889 = vmatpush1.bf16.msra.mxu0 0
        %890 = vmatprep.mubr.bf16.mxu0 0
        %891 = vmatmul.mubr.bf16.gmra.mrb[0].mxu0 %v856
        %v892 = vpop.f32.mrb[0].mxu0
        %v893 = vadd.f32 0.0, %v892
        %v894 = vpop.f32.mrb[0].mxu0
        %v895 = vpop.f32.mrb[0].mxu0
        %v896 = vadd.f32 0.0, %v895
        %v897 = vpop.f32.mrb[0].mxu0
        %898 = vdwg.mxu0
        %v899 = vpack.c.bf16 %v553, %v550
        %v900 = vpack.c.bf16 %v602, %v599
        %v901 = vpack.c.bf16 %v651, %v648
        %v902 = vpack.c.bf16 %v700, %v697
        %v903 = vpack.c.bf16 %v749, %v746
        %v904 = vpack.c.bf16 %v798, %v795
        %v905 = vpack.c.bf16 %v847, %v844
        %v906 = vpack.c.bf16 %v896, %v893
        %v907 = vld [vmem:[%s2] sm:$0xf]
        %v908 = vld [vmem:[%s2 + $0x4] sm:$0xf]
        %v909 = vld [vmem:[%s2 + $0x8] sm:$0xf]
        %v910 = vld [vmem:[%s2 + $0xc] sm:$0xf]
        %v911 = vld [vmem:[%s2 + $0x10] sm:$0xf]
        %v912 = vld [vmem:[%s2 + $0x14] sm:$0xf]
        %v913 = vld [vmem:[%s2 + $0x18] sm:$0xf]
        %v914 = vld [vmem:[%s2 + $0x1c] sm:$0xf]
        %v915 = vld [vmem:[%s3] sm:$0x1]
        %v917 = vlaneseq
        %v918 = vshrl.u32 %v917, 7
        %v919 = vsub.s32 0, %v918
        %v920 = vrot.slane %v915, %v919
        %v930 = vunpack.c.l.b16 %v907
        %v931 = vunpack.c.l.b16 %v908
        %v932 = vunpack.c.l.b16 %v909
        %v933 = vunpack.c.l.b16 %v910
        %v934 = vunpack.c.l.b16 %v911
        %v935 = vunpack.c.l.b16 %v912
        %v936 = vunpack.c.l.b16 %v913
        %v937 = vunpack.c.l.b16 %v914
        %v938 = vpack.c.b16 %v931, %v930
        %v939 = vpack.c.b16 %v933, %v932
        %v940 = vpack.c.b16 %v935, %v934
        %v941 = vpack.c.b16 %v937, %v936
        %vm946 = vcmask 523264
        %v948 = vsel %vm946, %v899, 0
        %v951 = vsel %vm946, %v900, 0
        %v954 = vsel %vm946, %v901, 0
        %v957 = vsel %vm946, %v902, 0
        %v960 = vsel %vm946, %v903, 0
        %v963 = vsel %vm946, %v904, 0
        %v966 = vsel %vm946, %v905, 0
        %v969 = vsel %vm946, %v906, 0
        %971 = vmatprep.subr.bf16.mxu0 0
        %972 = vmatpush1.bf16.msra.mxu0 %v938
        %973 = vmatprep.subr.bf16.mxu0 0
        %974 = vmatpush1.bf16.msra.mxu0 %v939
        %975 = vmatprep.subr.bf16.mxu0 0
        %976 = vmatpush1.bf16.msra.mxu0 %v940
        %977 = vmatprep.subr.bf16.mxu0 0
        %978 = vmatpush1.bf16.msra.mxu0 %v941
        %979 = vmatprep.subr.bf16.mxu0 0
        %980 = vmatpush1.bf16.msra.mxu0 0
        %981 = vmatprep.subr.bf16.mxu0 0
        %982 = vmatpush1.bf16.msra.mxu0 0
        %983 = vmatprep.subr.bf16.mxu0 0
        %984 = vmatpush1.bf16.msra.mxu0 0
        %985 = vmatprep.subr.bf16.mxu0 0
        %986 = vmatpush1.bf16.msra.mxu0 0
        %987 = vmatprep.subr.bf16.mxu0 0
        %988 = vmatpush1.bf16.msra.mxu0 0
        %989 = vmatprep.subr.bf16.mxu0 0
        %990 = vmatpush1.bf16.msra.mxu0 0
        %991 = vmatprep.subr.bf16.mxu0 0
        %992 = vmatpush1.bf16.msra.mxu0 0
        %993 = vmatprep.subr.bf16.mxu0 0
        %994 = vmatpush1.bf16.msra.mxu0 0
        %995 = vmatprep.subr.bf16.mxu0 0
        %996 = vmatpush1.bf16.msra.mxu0 0
        %997 = vmatprep.subr.bf16.mxu0 0
        %998 = vmatpush1.bf16.msra.mxu0 0
        %999 = vmatprep.subr.bf16.mxu0 0
        %1000 = vmatpush1.bf16.msra.mxu0 0
        %1001 = vmatprep.subr.bf16.mxu0 0
        %1002 = vmatpush1.bf16.msra.mxu0 0
        %1003 = vmatprep.mubr.bf16.mxu0 0
        %1004 = vmatmul.mubr.bf16.gmra.mrb[0].mxu0 %v948
        %v1005 = vpop.f32.mrb[0].mxu0
        %v1006 = vadd.f32 %v920, %v1005
        %v1007 = vpop.f32.mrb[0].mxu0
        %v1008 = vpop.f32.mrb[0].mxu0
        %v1009 = vadd.f32 %v920, %v1008
        %v1010 = vpop.f32.mrb[0].mxu0
        %1011 = vmatprep.mubr.bf16.mxu0 0
        %1012 = vmatmul.mubr.bf16.gmra.mrb[0].mxu0 %v951
        %v1013 = vpop.f32.mrb[0].mxu0
        %v1014 = vadd.f32 %v920, %v1013
        %v1015 = vpop.f32.mrb[0].mxu0
        %v1016 = vpop.f32.mrb[0].mxu0
        %v1017 = vadd.f32 %v920, %v1016
        %v1018 = vpop.f32.mrb[0].mxu0
        %1019 = vmatprep.mubr.bf16.mxu0 0
        %1020 = vmatmul.mubr.bf16.gmra.mrb[0].mxu0 %v954
        %v1021 = vpop.f32.mrb[0].mxu0
        %v1022 = vadd.f32 %v920, %v1021
        %v1023 = vpop.f32.mrb[0].mxu0
        %v1024 = vpop.f32.mrb[0].mxu0
        %v1025 = vadd.f32 %v920, %v1024
        %v1026 = vpop.f32.mrb[0].mxu0
        %1027 = vmatprep.mubr.bf16.mxu0 0
        %1028 = vmatmul.mubr.bf16.gmra.mrb[0].mxu0 %v957
        %v1029 = vpop.f32.mrb[0].mxu0
        %v1030 = vadd.f32 %v920, %v1029
        %v1031 = vpop.f32.mrb[0].mxu0
        %v1032 = vpop.f32.mrb[0].mxu0
        %v1033 = vadd.f32 %v920, %v1032
        %v1034 = vpop.f32.mrb[0].mxu0
        %1035 = vmatprep.mubr.bf16.mxu0 0
        %1036 = vmatmul.mubr.bf16.gmra.mrb[0].mxu0 %v960
        %v1037 = vpop.f32.mrb[0].mxu0
        %v1038 = vadd.f32 %v920, %v1037
        %v1039 = vpop.f32.mrb[0].mxu0
        %v1040 = vpop.f32.mrb[0].mxu0
        %v1041 = vadd.f32 %v920, %v1040
        %v1042 = vpop.f32.mrb[0].mxu0
        %1043 = vmatprep.mubr.bf16.mxu0 0
        %1044 = vmatmul.mubr.bf16.gmra.mrb[0].mxu0 %v963
        %v1045 = vpop.f32.mrb[0].mxu0
        %v1046 = vadd.f32 %v920, %v1045
        %v1047 = vpop.f32.mrb[0].mxu0
        %v1048 = vpop.f32.mrb[0].mxu0
        %v1049 = vadd.f32 %v920, %v1048
        %v1050 = vpop.f32.mrb[0].mxu0
        %1051 = vmatprep.mubr.bf16.mxu0 0
        %1052 = vmatmul.mubr.bf16.gmra.mrb[0].mxu0 %v966
        %v1053 = vpop.f32.mrb[0].mxu0
        %v1054 = vadd.f32 %v920, %v1053
        %v1055 = vpop.f32.mrb[0].mxu0
        %v1056 = vpop.f32.mrb[0].mxu0
        %v1057 = vadd.f32 %v920, %v1056
        %v1058 = vpop.f32.mrb[0].mxu0
        %1059 = vmatprep.mubr.bf16.mxu0 0
        %1060 = vmatmul.mubr.bf16.gmra.mrb[0].mxu0 %v969
        %v1061 = vpop.f32.mrb[0].mxu0
        %v1062 = vadd.f32 %v920, %v1061
        %v1063 = vpop.f32.mrb[0].mxu0
        %v1064 = vpop.f32.mrb[0].mxu0
        %v1065 = vadd.f32 %v920, %v1064
        %v1066 = vpop.f32.mrb[0].mxu0
        %1067 = vdwg.mxu0
        %v1068 = vmul.f32 %v1006, %v483
        %v1069 = vmul.f32 %v1009, %v484
        %v1070 = vmul.f32 %v1014, %v485
        %v1071 = vmul.f32 %v1017, %v486
        %v1072 = vmul.f32 %v1022, %v487
        %v1073 = vmul.f32 %v1025, %v488
        %v1074 = vmul.f32 %v1030, %v489
        %v1075 = vmul.f32 %v1033, %v490
        %v1076 = vmul.f32 %v1038, %v491
        %v1077 = vmul.f32 %v1041, %v492
        %v1078 = vmul.f32 %v1046, %v493
        %v1079 = vmul.f32 %v1049, %v494
        %v1080 = vmul.f32 %v1054, %v495
        %v1081 = vmul.f32 %v1057, %v496
        %v1082 = vmul.f32 %v1062, %v497
        %v1083 = vmul.f32 %v1065, %v498
        %v1084 = vmax.f32 %v1068, 0.0
        %v1085 = vmax.f32 %v1069, 0.0
        %v1086 = vmax.f32 %v1070, 0.0
        %v1087 = vmax.f32 %v1071, 0.0
        %v1088 = vmax.f32 %v1072, 0.0
        %v1089 = vmax.f32 %v1073, 0.0
        %v1090 = vmax.f32 %v1074, 0.0
        %v1091 = vmax.f32 %v1075, 0.0
        %v1092 = vmax.f32 %v1076, 0.0
        %v1093 = vmax.f32 %v1077, 0.0
        %v1094 = vmax.f32 %v1078, 0.0
        %v1095 = vmax.f32 %v1079, 0.0
        %v1096 = vmax.f32 %v1080, 0.0
        %v1097 = vmax.f32 %v1081, 0.0
        %v1098 = vmax.f32 %v1082, 0.0
        %v1099 = vmax.f32 %v1083, 0.0
        %v1100 = vpack.c.bf16 %v1085, %v1084
        %v1101 = vpack.c.bf16 %v1087, %v1086
        %v1102 = vpack.c.bf16 %v1089, %v1088
        %v1103 = vpack.c.bf16 %v1091, %v1090
        %v1104 = vpack.c.bf16 %v1093, %v1092
        %v1105 = vpack.c.bf16 %v1095, %v1094
        %v1106 = vpack.c.bf16 %v1097, %v1096
        %v1107 = vpack.c.bf16 %v1099, %v1098
        %1108 = vmatprep.subr.bf16.mxu0 0
        %1109 = vmatpush1.bf16.msra.mxu0 %v1100
        %1110 = vmatprep.subr.bf16.mxu0 0
        %1111 = vmatpush1.bf16.msra.mxu0 0
        %1112 = vmatprep.subr.bf16.mxu0 0
        %1113 = vmatpush1.bf16.msra.mxu0 0
        %1114 = vmatprep.subr.bf16.mxu0 0
        %1115 = vmatpush1.bf16.msra.mxu0 0
        %1116 = vmatprep.subr.bf16.mxu0 0
        %1117 = vmatpush1.bf16.msra.mxu0 0
        %1118 = vmatprep.subr.bf16.mxu0 0
        %1119 = vmatpush1.bf16.msra.mxu0 0
        %1120 = vmatprep.subr.bf16.mxu0 0
        %1121 = vmatpush1.bf16.msra.mxu0 0
        %1122 = vmatprep.subr.bf16.mxu0 0
        %1123 = vmatpush1.bf16.msra.mxu0 0
        %1124 = vmatprep.subr.bf16.mxu0 0
        %1125 = vmatpush1.bf16.msra.mxu0 0
        %1126 = vmatprep.subr.bf16.mxu0 0
        %1127 = vmatpush1.bf16.msra.mxu0 0
        %1128 = vmatprep.subr.bf16.mxu0 0
        %1129 = vmatpush1.bf16.msra.mxu0 0
        %1130 = vmatprep.subr.bf16.mxu0 0
        %1131 = vmatpush1.bf16.msra.mxu0 0
        %1132 = vmatprep.subr.bf16.mxu0 0
        %1133 = vmatpush1.bf16.msra.mxu0 0
        %1134 = vmatprep.subr.bf16.mxu0 0
        %1135 = vmatpush1.bf16.msra.mxu0 0
        %1136 = vmatprep.subr.bf16.mxu0 0
        %1137 = vmatpush1.bf16.msra.mxu0 0
        %1138 = vmatprep.subr.bf16.mxu0 0
        %1139 = vmatpush1.bf16.msra.mxu0 0
        %1140 = vmatprep.mubr.bf16.mxu0 0
        %1141 = vmatmul.mubr.bf16.gmra.mrb[0].mxu0 %v513
        %v1142 = vpop.f32.mrb[0].mxu0
        %v1143 = vadd.f32 0.0, %v1142
        %v1144 = vpop.f32.mrb[0].mxu0
        %v1145 = vpop.f32.mrb[0].mxu0
        %v1146 = vadd.f32 0.0, %v1145
        %v1147 = vpop.f32.mrb[0].mxu0
        %1148 = vdwg.mxu0
        %1149 = vmatprep.subr.bf16.mxu0 0
        %1150 = vmatpush1.bf16.msra.mxu0 %v1101
        %1151 = vmatprep.subr.bf16.mxu0 0
        %1152 = vmatpush1.bf16.msra.mxu0 0
        %1153 = vmatprep.subr.bf16.mxu0 0
        %1154 = vmatpush1.bf16.msra.mxu0 0
        %1155 = vmatprep.subr.bf16.mxu0 0
        %1156 = vmatpush1.bf16.msra.mxu0 0
        %1157 = vmatprep.subr.bf16.mxu0 0
        %1158 = vmatpush1.bf16.msra.mxu0 0
        %1159 = vmatprep.subr.bf16.mxu0 0
        %1160 = vmatpush1.bf16.msra.mxu0 0
        %1161 = vmatprep.subr.bf16.mxu0 0
        %1162 = vmatpush1.bf16.msra.mxu0 0
        %1163 = vmatprep.subr.bf16.mxu0 0
        %1164 = vmatpush1.bf16.msra.mxu0 0
        %1165 = vmatprep.subr.bf16.mxu0 0
        %1166 = vmatpush1.bf16.msra.mxu0 0
        %1167 = vmatprep.subr.bf16.mxu0 0
        %1168 = vmatpush1.bf16.msra.mxu0 0
        %1169 = vmatprep.subr.bf16.mxu0 0
        %1170 = vmatpush1.bf16.msra.mxu0 0
        %1171 = vmatprep.subr.bf16.mxu0 0
        %1172 = vmatpush1.bf16.msra.mxu0 0
        %1173 = vmatprep.subr.bf16.mxu0 0
        %1174 = vmatpush1.bf16.msra.mxu0 0
        %1175 = vmatprep.subr.bf16.mxu0 0
        %1176 = vmatpush1.bf16.msra.mxu0 0
        %1177 = vmatprep.subr.bf16.mxu0 0
        %1178 = vmatpush1.bf16.msra.mxu0 0
        %1179 = vmatprep.subr.bf16.mxu0 0
        %1180 = vmatpush1.bf16.msra.mxu0 0
        %1181 = vmatprep.mubr.bf16.mxu0 0
        %1182 = vmatmul.mubr.bf16.gmra.mrb[0].mxu0 %v562
        %v1183 = vpop.f32.mrb[0].mxu0
        %v1184 = vadd.f32 0.0, %v1183
        %v1185 = vpop.f32.mrb[0].mxu0
        %v1186 = vpop.f32.mrb[0].mxu0
        %v1187 = vadd.f32 0.0, %v1186
        %v1188 = vpop.f32.mrb[0].mxu0
        %1189 = vdwg.mxu0
        %1190 = vmatprep.subr.bf16.mxu0 0
        %1191 = vmatpush1.bf16.msra.mxu0 %v1102
        %1192 = vmatprep.subr.bf16.mxu0 0
        %1193 = vmatpush1.bf16.msra.mxu0 0
        %1194 = vmatprep.subr.bf16.mxu0 0
        %1195 = vmatpush1.bf16.msra.mxu0 0
        %1196 = vmatprep.subr.bf16.mxu0 0
        %1197 = vmatpush1.bf16.msra.mxu0 0
        %1198 = vmatprep.subr.bf16.mxu0 0
        %1199 = vmatpush1.bf16.msra.mxu0 0
        %1200 = vmatprep.subr.bf16.mxu0 0
        %1201 = vmatpush1.bf16.msra.mxu0 0
        %1202 = vmatprep.subr.bf16.mxu0 0
        %1203 = vmatpush1.bf16.msra.mxu0 0
        %1204 = vmatprep.subr.bf16.mxu0 0
        %1205 = vmatpush1.bf16.msra.mxu0 0
        %1206 = vmatprep.subr.bf16.mxu0 0
        %1207 = vmatpush1.bf16.msra.mxu0 0
        %1208 = vmatprep.subr.bf16.mxu0 0
        %1209 = vmatpush1.bf16.msra.mxu0 0
        %1210 = vmatprep.subr.bf16.mxu0 0
        %1211 = vmatpush1.bf16.msra.mxu0 0
        %1212 = vmatprep.subr.bf16.mxu0 0
        %1213 = vmatpush1.bf16.msra.mxu0 0
        %1214 = vmatprep.subr.bf16.mxu0 0
        %1215 = vmatpush1.bf16.msra.mxu0 0
        %1216 = vmatprep.subr.bf16.mxu0 0
        %1217 = vmatpush1.bf16.msra.mxu0 0
        %1218 = vmatprep.subr.bf16.mxu0 0
        %1219 = vmatpush1.bf16.msra.mxu0 0
        %1220 = vmatprep.subr.bf16.mxu0 0
        %1221 = vmatpush1.bf16.msra.mxu0 0
        %1222 = vmatprep.mubr.bf16.mxu0 0
        %1223 = vmatmul.mubr.bf16.gmra.mrb[0].mxu0 %v611
        %v1224 = vpop.f32.mrb[0].mxu0
        %v1225 = vadd.f32 0.0, %v1224
        %v1226 = vpop.f32.mrb[0].mxu0
        %v1227 = vpop.f32.mrb[0].mxu0
        %v1228 = vadd.f32 0.0, %v1227
        %v1229 = vpop.f32.mrb[0].mxu0
        %1230 = vdwg.mxu0
        %1231 = vmatprep.subr.bf16.mxu0 0
        %1232 = vmatpush1.bf16.msra.mxu0 %v1103
        %1233 = vmatprep.subr.bf16.mxu0 0
        %1234 = vmatpush1.bf16.msra.mxu0 0
        %1235 = vmatprep.subr.bf16.mxu0 0
        %1236 = vmatpush1.bf16.msra.mxu0 0
        %1237 = vmatprep.subr.bf16.mxu0 0
        %1238 = vmatpush1.bf16.msra.mxu0 0
        %1239 = vmatprep.subr.bf16.mxu0 0
        %1240 = vmatpush1.bf16.msra.mxu0 0
        %1241 = vmatprep.subr.bf16.mxu0 0
        %1242 = vmatpush1.bf16.msra.mxu0 0
        %1243 = vmatprep.subr.bf16.mxu0 0
        %1244 = vmatpush1.bf16.msra.mxu0 0
        %1245 = vmatprep.subr.bf16.mxu0 0
        %1246 = vmatpush1.bf16.msra.mxu0 0
        %1247 = vmatprep.subr.bf16.mxu0 0
        %1248 = vmatpush1.bf16.msra.mxu0 0
        %1249 = vmatprep.subr.bf16.mxu0 0
        %1250 = vmatpush1.bf16.msra.mxu0 0
        %1251 = vmatprep.subr.bf16.mxu0 0
        %1252 = vmatpush1.bf16.msra.mxu0 0
        %1253 = vmatprep.subr.bf16.mxu0 0
        %1254 = vmatpush1.bf16.msra.mxu0 0
        %1255 = vmatprep.subr.bf16.mxu0 0
        %1256 = vmatpush1.bf16.msra.mxu0 0
        %1257 = vmatprep.subr.bf16.mxu0 0
        %1258 = vmatpush1.bf16.msra.mxu0 0
        %1259 = vmatprep.subr.bf16.mxu0 0
        %1260 = vmatpush1.bf16.msra.mxu0 0
        %1261 = vmatprep.subr.bf16.mxu0 0
        %1262 = vmatpush1.bf16.msra.mxu0 0
        %1263 = vmatprep.mubr.bf16.mxu0 0
        %1264 = vmatmul.mubr.bf16.gmra.mrb[0].mxu0 %v660
        %v1265 = vpop.f32.mrb[0].mxu0
        %v1266 = vadd.f32 0.0, %v1265
        %v1267 = vpop.f32.mrb[0].mxu0
        %v1268 = vpop.f32.mrb[0].mxu0
        %v1269 = vadd.f32 0.0, %v1268
        %v1270 = vpop.f32.mrb[0].mxu0
        %1271 = vdwg.mxu0
        %1272 = vmatprep.subr.bf16.mxu0 0
        %1273 = vmatpush1.bf16.msra.mxu0 %v1104
        %1274 = vmatprep.subr.bf16.mxu0 0
        %1275 = vmatpush1.bf16.msra.mxu0 0
        %1276 = vmatprep.subr.bf16.mxu0 0
        %1277 = vmatpush1.bf16.msra.mxu0 0
        %1278 = vmatprep.subr.bf16.mxu0 0
        %1279 = vmatpush1.bf16.msra.mxu0 0
        %1280 = vmatprep.subr.bf16.mxu0 0
        %1281 = vmatpush1.bf16.msra.mxu0 0
        %1282 = vmatprep.subr.bf16.mxu0 0
        %1283 = vmatpush1.bf16.msra.mxu0 0
        %1284 = vmatprep.subr.bf16.mxu0 0
        %1285 = vmatpush1.bf16.msra.mxu0 0
        %1286 = vmatprep.subr.bf16.mxu0 0
        %1287 = vmatpush1.bf16.msra.mxu0 0
        %1288 = vmatprep.subr.bf16.mxu0 0
        %1289 = vmatpush1.bf16.msra.mxu0 0
        %1290 = vmatprep.subr.bf16.mxu0 0
        %1291 = vmatpush1.bf16.msra.mxu0 0
        %1292 = vmatprep.subr.bf16.mxu0 0
        %1293 = vmatpush1.bf16.msra.mxu0 0
        %1294 = vmatprep.subr.bf16.mxu0 0
        %1295 = vmatpush1.bf16.msra.mxu0 0
        %1296 = vmatprep.subr.bf16.mxu0 0
        %1297 = vmatpush1.bf16.msra.mxu0 0
        %1298 = vmatprep.subr.bf16.mxu0 0
        %1299 = vmatpush1.bf16.msra.mxu0 0
        %1300 = vmatprep.subr.bf16.mxu0 0
        %1301 = vmatpush1.bf16.msra.mxu0 0
        %1302 = vmatprep.subr.bf16.mxu0 0
        %1303 = vmatpush1.bf16.msra.mxu0 0
        %1304 = vmatprep.mubr.bf16.mxu0 0
        %1305 = vmatmul.mubr.bf16.gmra.mrb[0].mxu0 %v709
        %v1306 = vpop.f32.mrb[0].mxu0
        %v1307 = vadd.f32 0.0, %v1306
        %v1308 = vpop.f32.mrb[0].mxu0
        %v1309 = vpop.f32.mrb[0].mxu0
        %v1310 = vadd.f32 0.0, %v1309
        %v1311 = vpop.f32.mrb[0].mxu0
        %1312 = vdwg.mxu0
        %1313 = vmatprep.subr.bf16.mxu0 0
        %1314 = vmatpush1.bf16.msra.mxu0 %v1105
        %1315 = vmatprep.subr.bf16.mxu0 0
        %1316 = vmatpush1.bf16.msra.mxu0 0
        %1317 = vmatprep.subr.bf16.mxu0 0
        %1318 = vmatpush1.bf16.msra.mxu0 0
        %1319 = vmatprep.subr.bf16.mxu0 0
        %1320 = vmatpush1.bf16.msra.mxu0 0
        %1321 = vmatprep.subr.bf16.mxu0 0
        %1322 = vmatpush1.bf16.msra.mxu0 0
        %1323 = vmatprep.subr.bf16.mxu0 0
        %1324 = vmatpush1.bf16.msra.mxu0 0
        %1325 = vmatprep.subr.bf16.mxu0 0
        %1326 = vmatpush1.bf16.msra.mxu0 0
        %1327 = vmatprep.subr.bf16.mxu0 0
        %1328 = vmatpush1.bf16.msra.mxu0 0
        %1329 = vmatprep.subr.bf16.mxu0 0
        %1330 = vmatpush1.bf16.msra.mxu0 0
        %1331 = vmatprep.subr.bf16.mxu0 0
        %1332 = vmatpush1.bf16.msra.mxu0 0
        %1333 = vmatprep.subr.bf16.mxu0 0
        %1334 = vmatpush1.bf16.msra.mxu0 0
        %1335 = vmatprep.subr.bf16.mxu0 0
        %1336 = vmatpush1.bf16.msra.mxu0 0
        %1337 = vmatprep.subr.bf16.mxu0 0
        %1338 = vmatpush1.bf16.msra.mxu0 0
        %1339 = vmatprep.subr.bf16.mxu0 0
        %1340 = vmatpush1.bf16.msra.mxu0 0
        %1341 = vmatprep.subr.bf16.mxu0 0
        %1342 = vmatpush1.bf16.msra.mxu0 0
        %1343 = vmatprep.subr.bf16.mxu0 0
        %1344 = vmatpush1.bf16.msra.mxu0 0
        %1345 = vmatprep.mubr.bf16.mxu0 0
        %1346 = vmatmul.mubr.bf16.gmra.mrb[0].mxu0 %v758
        %v1347 = vpop.f32.mrb[0].mxu0
        %v1348 = vadd.f32 0.0, %v1347
        %v1349 = vpop.f32.mrb[0].mxu0
        %v1350 = vpop.f32.mrb[0].mxu0
        %v1351 = vadd.f32 0.0, %v1350
        %v1352 = vpop.f32.mrb[0].mxu0
        %1353 = vdwg.mxu0
        %1354 = vmatprep.subr.bf16.mxu0 0
        %1355 = vmatpush1.bf16.msra.mxu0 %v1106
        %1356 = vmatprep.subr.bf16.mxu0 0
        %1357 = vmatpush1.bf16.msra.mxu0 0
        %1358 = vmatprep.subr.bf16.mxu0 0
        %1359 = vmatpush1.bf16.msra.mxu0 0
        %1360 = vmatprep.subr.bf16.mxu0 0
        %1361 = vmatpush1.bf16.msra.mxu0 0
        %1362 = vmatprep.subr.bf16.mxu0 0
        %1363 = vmatpush1.bf16.msra.mxu0 0
        %1364 = vmatprep.subr.bf16.mxu0 0
        %1365 = vmatpush1.bf16.msra.mxu0 0
        %1366 = vmatprep.subr.bf16.mxu0 0
        %1367 = vmatpush1.bf16.msra.mxu0 0
        %1368 = vmatprep.subr.bf16.mxu0 0
        %1369 = vmatpush1.bf16.msra.mxu0 0
        %1370 = vmatprep.subr.bf16.mxu0 0
        %1371 = vmatpush1.bf16.msra.mxu0 0
        %1372 = vmatprep.subr.bf16.mxu0 0
        %1373 = vmatpush1.bf16.msra.mxu0 0
        %1374 = vmatprep.subr.bf16.mxu0 0
        %1375 = vmatpush1.bf16.msra.mxu0 0
        %1376 = vmatprep.subr.bf16.mxu0 0
        %1377 = vmatpush1.bf16.msra.mxu0 0
        %1378 = vmatprep.subr.bf16.mxu0 0
        %1379 = vmatpush1.bf16.msra.mxu0 0
        %1380 = vmatprep.subr.bf16.mxu0 0
        %1381 = vmatpush1.bf16.msra.mxu0 0
        %1382 = vmatprep.subr.bf16.mxu0 0
        %1383 = vmatpush1.bf16.msra.mxu0 0
        %1384 = vmatprep.subr.bf16.mxu0 0
        %1385 = vmatpush1.bf16.msra.mxu0 0
        %1386 = vmatprep.mubr.bf16.mxu0 0
        %1387 = vmatmul.mubr.bf16.gmra.mrb[0].mxu0 %v807
        %v1388 = vpop.f32.mrb[0].mxu0
        %v1389 = vadd.f32 0.0, %v1388
        %v1390 = vpop.f32.mrb[0].mxu0
        %v1391 = vpop.f32.mrb[0].mxu0
        %v1392 = vadd.f32 0.0, %v1391
        %v1393 = vpop.f32.mrb[0].mxu0
        %1394 = vdwg.mxu0
        %1395 = vmatprep.subr.bf16.mxu0 0
        %1396 = vmatpush1.bf16.msra.mxu0 %v1107
        %1397 = vmatprep.subr.bf16.mxu0 0
        %1398 = vmatpush1.bf16.msra.mxu0 0
        %1399 = vmatprep.subr.bf16.mxu0 0
        %1400 = vmatpush1.bf16.msra.mxu0 0
        %1401 = vmatprep.subr.bf16.mxu0 0
        %1402 = vmatpush1.bf16.msra.mxu0 0
        %1403 = vmatprep.subr.bf16.mxu0 0
        %1404 = vmatpush1.bf16.msra.mxu0 0
        %1405 = vmatprep.subr.bf16.mxu0 0
        %1406 = vmatpush1.bf16.msra.mxu0 0
        %1407 = vmatprep.subr.bf16.mxu0 0
        %1408 = vmatpush1.bf16.msra.mxu0 0
        %1409 = vmatprep.subr.bf16.mxu0 0
        %1410 = vmatpush1.bf16.msra.mxu0 0
        %1411 = vmatprep.subr.bf16.mxu0 0
        %1412 = vmatpush1.bf16.msra.mxu0 0
        %1413 = vmatprep.subr.bf16.mxu0 0
        %1414 = vmatpush1.bf16.msra.mxu0 0
        %1415 = vmatprep.subr.bf16.mxu0 0
        %1416 = vmatpush1.bf16.msra.mxu0 0
        %1417 = vmatprep.subr.bf16.mxu0 0
        %1418 = vmatpush1.bf16.msra.mxu0 0
        %1419 = vmatprep.subr.bf16.mxu0 0
        %1420 = vmatpush1.bf16.msra.mxu0 0
        %1421 = vmatprep.subr.bf16.mxu0 0
        %1422 = vmatpush1.bf16.msra.mxu0 0
        %1423 = vmatprep.subr.bf16.mxu0 0
        %1424 = vmatpush1.bf16.msra.mxu0 0
        %1425 = vmatprep.subr.bf16.mxu0 0
        %1426 = vmatpush1.bf16.msra.mxu0 0
        %1427 = vmatprep.mubr.bf16.mxu0 0
        %1428 = vmatmul.mubr.bf16.gmra.mrb[0].mxu0 %v856
        %v1429 = vpop.f32.mrb[0].mxu0
        %v1430 = vadd.f32 0.0, %v1429
        %v1431 = vpop.f32.mrb[0].mxu0
        %v1432 = vpop.f32.mrb[0].mxu0
        %v1433 = vadd.f32 0.0, %v1432
        %v1434 = vpop.f32.mrb[0].mxu0
        %1435 = vdwg.mxu0
        %v1436 = vpack.c.bf16 %v1146, %v1143
        %v1437 = vpack.c.bf16 %v1187, %v1184
        %v1438 = vpack.c.bf16 %v1228, %v1225
        %v1439 = vpack.c.bf16 %v1269, %v1266
        %v1440 = vpack.c.bf16 %v1310, %v1307
        %v1441 = vpack.c.bf16 %v1351, %v1348
        %v1442 = vpack.c.bf16 %v1392, %v1389
        %v1443 = vpack.c.bf16 %v1433, %v1430
        %v1444 = vld [vmem:[%s4] sm:$0xf]
        %v1445 = vld [vmem:[%s4 + $0x4] sm:$0xf]
        %v1446 = vld [vmem:[%s4 + $0x8] sm:$0xf]
        %v1447 = vld [vmem:[%s4 + $0xc] sm:$0xf]
        %v1448 = vld [vmem:[%s4 + $0x10] sm:$0xf]
        %v1449 = vld [vmem:[%s4 + $0x14] sm:$0xf]
        %v1450 = vld [vmem:[%s4 + $0x18] sm:$0xf]
        %v1451 = vld [vmem:[%s4 + $0x1c] sm:$0xf]
        %v1452 = vld [vmem:[%s4 + $0x20] sm:$0xf]
        %v1453 = vld [vmem:[%s4 + $0x24] sm:$0xf]
        %v1454 = vld [vmem:[%s4 + $0x28] sm:$0xf]
        %v1455 = vld [vmem:[%s4 + $0x2c] sm:$0xf]
        %v1460 = vunpack.c.l.b16 %v1452
        %v1461 = vunpack.c.l.b16 %v1453
        %v1462 = vunpack.c.l.b16 %v1454
        %v1463 = vunpack.c.l.b16 %v1455
        %v1464 = vpack.c.b16 %v1461, %v1460
        %v1465 = vpack.c.b16 %v1463, %v1462
        %vm1468 = vcmask 261120
        %v1470 = vsel %vm1468, %v1436, 0
        %v1473 = vsel %vm1468, %v1437, 0
        %v1476 = vsel %vm1468, %v1438, 0
        %v1479 = vsel %vm1468, %v1439, 0
        %v1482 = vsel %vm1468, %v1440, 0
        %v1485 = vsel %vm1468, %v1441, 0
        %v1488 = vsel %vm1468, %v1442, 0
        %v1491 = vsel %vm1468, %v1443, 0
        %1493 = vmatprep.subr.bf16.mxu0 0
        %1494 = vmatpush1.bf16.msra.mxu0 %v1464
        %1495 = vmatprep.subr.bf16.mxu0 0
        %1496 = vmatpush1.bf16.msra.mxu0 %v1465
        %1497 = vmatprep.subr.bf16.mxu0 0
        %1498 = vmatpush1.bf16.msra.mxu0 0
        %1499 = vmatprep.subr.bf16.mxu0 0
        %1500 = vmatpush1.bf16.msra.mxu0 0
        %1501 = vmatprep.subr.bf16.mxu0 0
        %1502 = vmatpush1.bf16.msra.mxu0 0
        %1503 = vmatprep.subr.bf16.mxu0 0
        %1504 = vmatpush1.bf16.msra.mxu0 0
        %1505 = vmatprep.subr.bf16.mxu0 0
        %1506 = vmatpush1.bf16.msra.mxu0 0
        %1507 = vmatprep.subr.bf16.mxu0 0
        %1508 = vmatpush1.bf16.msra.mxu0 0
        %1509 = vmatprep.subr.bf16.mxu0 0
        %1510 = vmatpush1.bf16.msra.mxu0 0
        %1511 = vmatprep.subr.bf16.mxu0 0
        %1512 = vmatpush1.bf16.msra.mxu0 0
        %1513 = vmatprep.subr.bf16.mxu0 0
        %1514 = vmatpush1.bf16.msra.mxu0 0
        %1515 = vmatprep.subr.bf16.mxu0 0
        %1516 = vmatpush1.bf16.msra.mxu0 0
        %1517 = vmatprep.subr.bf16.mxu0 0
        %1518 = vmatpush1.bf16.msra.mxu0 0
        %1519 = vmatprep.subr.bf16.mxu0 0
        %1520 = vmatpush1.bf16.msra.mxu0 0
        %1521 = vmatprep.subr.bf16.mxu0 0
        %1522 = vmatpush1.bf16.msra.mxu0 0
        %1523 = vmatprep.subr.bf16.mxu0 0
        %1524 = vmatpush1.bf16.msra.mxu0 0
        %1525 = vmatprep.mubr.bf16.mxu0 0
        %1526 = vmatmul.mubr.bf16.gmra.mrb[0].mxu0 %v1470
        %v1527 = vpop.f32.mrb[0].mxu0
        %v1528 = vadd.f32 0.0, %v1527
        %v1529 = vpop.f32.mrb[0].mxu0
        %v1530 = vpop.f32.mrb[0].mxu0
        %v1531 = vadd.f32 0.0, %v1530
        %v1532 = vpop.f32.mrb[0].mxu0
        %1533 = vmatprep.mubr.bf16.mxu0 0
        %1534 = vmatmul.mubr.bf16.gmra.mrb[0].mxu0 %v1473
        %v1535 = vpop.f32.mrb[0].mxu0
        %v1536 = vadd.f32 0.0, %v1535
        %v1537 = vpop.f32.mrb[0].mxu0
        %v1538 = vpop.f32.mrb[0].mxu0
        %v1539 = vadd.f32 0.0, %v1538
        %v1540 = vpop.f32.mrb[0].mxu0
        %1541 = vmatprep.mubr.bf16.mxu0 0
        %1542 = vmatmul.mubr.bf16.gmra.mrb[0].mxu0 %v1476
        %v1543 = vpop.f32.mrb[0].mxu0
        %v1544 = vadd.f32 0.0, %v1543
        %v1545 = vpop.f32.mrb[0].mxu0
        %v1546 = vpop.f32.mrb[0].mxu0
        %v1547 = vadd.f32 0.0, %v1546
        %v1548 = vpop.f32.mrb[0].mxu0
        %1549 = vmatprep.mubr.bf16.mxu0 0
        %1550 = vmatmul.mubr.bf16.gmra.mrb[0].mxu0 %v1479
        %v1551 = vpop.f32.mrb[0].mxu0
        %v1552 = vadd.f32 0.0, %v1551
        %v1553 = vpop.f32.mrb[0].mxu0
        %v1554 = vpop.f32.mrb[0].mxu0
        %v1555 = vadd.f32 0.0, %v1554
        %v1556 = vpop.f32.mrb[0].mxu0
        %1557 = vmatprep.mubr.bf16.mxu0 0
        %1558 = vmatmul.mubr.bf16.gmra.mrb[0].mxu0 %v1482
        %v1559 = vpop.f32.mrb[0].mxu0
        %v1560 = vadd.f32 0.0, %v1559
        %v1561 = vpop.f32.mrb[0].mxu0
        %v1562 = vpop.f32.mrb[0].mxu0
        %v1563 = vadd.f32 0.0, %v1562
        %v1564 = vpop.f32.mrb[0].mxu0
        %1565 = vmatprep.mubr.bf16.mxu0 0
        %1566 = vmatmul.mubr.bf16.gmra.mrb[0].mxu0 %v1485
        %v1567 = vpop.f32.mrb[0].mxu0
        %v1568 = vadd.f32 0.0, %v1567
        %v1569 = vpop.f32.mrb[0].mxu0
        %v1570 = vpop.f32.mrb[0].mxu0
        %v1571 = vadd.f32 0.0, %v1570
        %v1572 = vpop.f32.mrb[0].mxu0
        %1573 = vmatprep.mubr.bf16.mxu0 0
        %1574 = vmatmul.mubr.bf16.gmra.mrb[0].mxu0 %v1488
        %v1575 = vpop.f32.mrb[0].mxu0
        %v1576 = vadd.f32 0.0, %v1575
        %v1577 = vpop.f32.mrb[0].mxu0
        %v1578 = vpop.f32.mrb[0].mxu0
        %v1579 = vadd.f32 0.0, %v1578
        %v1580 = vpop.f32.mrb[0].mxu0
        %1581 = vmatprep.mubr.bf16.mxu0 0
        %1582 = vmatmul.mubr.bf16.gmra.mrb[0].mxu0 %v1491
        %v1583 = vpop.f32.mrb[0].mxu0
        %v1584 = vadd.f32 0.0, %v1583
        %v1585 = vpop.f32.mrb[0].mxu0
        %v1586 = vpop.f32.mrb[0].mxu0
        %v1587 = vadd.f32 0.0, %v1586
        %v1588 = vpop.f32.mrb[0].mxu0
        %1589 = vdwg.mxu0
        %v1598 = vunpack.c.l.b16 %v1444
        %v1599 = vunpack.c.l.b16 %v1445
        %v1600 = vunpack.c.l.b16 %v1446
        %v1601 = vunpack.c.l.b16 %v1447
        %v1602 = vunpack.c.l.b16 %v1448
        %v1603 = vunpack.c.l.b16 %v1449
        %v1604 = vunpack.c.l.b16 %v1450
        %v1605 = vunpack.c.l.b16 %v1451
        %v1606 = vpack.c.b16 %v1599, %v1598
        %v1607 = vpack.c.b16 %v1601, %v1600
        %v1608 = vpack.c.b16 %v1603, %v1602
        %v1609 = vpack.c.b16 %v1605, %v1604
        %1614 = vmatprep.subr.bf16.mxu0 0
        %1615 = vmatpush1.bf16.msra.mxu0 %v1606
        %1616 = vmatprep.subr.bf16.mxu0 0
        %1617 = vmatpush1.bf16.msra.mxu0 %v1607
        %1618 = vmatprep.subr.bf16.mxu0 0
        %1619 = vmatpush1.bf16.msra.mxu0 %v1608
        %1620 = vmatprep.subr.bf16.mxu0 0
        %1621 = vmatpush1.bf16.msra.mxu0 %v1609
        %1622 = vmatprep.subr.bf16.mxu0 0
        %1623 = vmatpush1.bf16.msra.mxu0 0
        %1624 = vmatprep.subr.bf16.mxu0 0
        %1625 = vmatpush1.bf16.msra.mxu0 0
        %1626 = vmatprep.subr.bf16.mxu0 0
        %1627 = vmatpush1.bf16.msra.mxu0 0
        %1628 = vmatprep.subr.bf16.mxu0 0
        %1629 = vmatpush1.bf16.msra.mxu0 0
        %1630 = vmatprep.subr.bf16.mxu0 0
        %1631 = vmatpush1.bf16.msra.mxu0 0
        %1632 = vmatprep.subr.bf16.mxu0 0
        %1633 = vmatpush1.bf16.msra.mxu0 0
        %1634 = vmatprep.subr.bf16.mxu0 0
        %1635 = vmatpush1.bf16.msra.mxu0 0
        %1636 = vmatprep.subr.bf16.mxu0 0
        %1637 = vmatpush1.bf16.msra.mxu0 0
        %1638 = vmatprep.subr.bf16.mxu0 0
        %1639 = vmatpush1.bf16.msra.mxu0 0
        %1640 = vmatprep.subr.bf16.mxu0 0
        %1641 = vmatpush1.bf16.msra.mxu0 0
        %1642 = vmatprep.subr.bf16.mxu0 0
        %1643 = vmatpush1.bf16.msra.mxu0 0
        %1644 = vmatprep.subr.bf16.mxu0 0
        %1645 = vmatpush1.bf16.msra.mxu0 0
        %1646 = vmatprep.mubr.bf16.mxu0 0
        %1647 = vmatmul.mubr.bf16.gmra.mrb[0].mxu0 %v948
        %v1648 = vpop.f32.mrb[0].mxu0
        %v1649 = vadd.f32 %v1528, %v1648
        %v1650 = vpop.f32.mrb[0].mxu0
        %v1651 = vpop.f32.mrb[0].mxu0
        %v1652 = vadd.f32 %v1531, %v1651
        %v1653 = vpop.f32.mrb[0].mxu0
        %1654 = vmatprep.mubr.bf16.mxu0 0
        %1655 = vmatmul.mubr.bf16.gmra.mrb[0].mxu0 %v951
        %v1656 = vpop.f32.mrb[0].mxu0
        %v1657 = vadd.f32 %v1536, %v1656
        %v1658 = vpop.f32.mrb[0].mxu0
        %v1659 = vpop.f32.mrb[0].mxu0
        %v1660 = vadd.f32 %v1539, %v1659
        %v1661 = vpop.f32.mrb[0].mxu0
        %1662 = vmatprep.mubr.bf16.mxu0 0
        %1663 = vmatmul.mubr.bf16.gmra.mrb[0].mxu0 %v954
        %v1664 = vpop.f32.mrb[0].mxu0
        %v1665 = vadd.f32 %v1544, %v1664
        %v1666 = vpop.f32.mrb[0].mxu0
        %v1667 = vpop.f32.mrb[0].mxu0
        %v1668 = vadd.f32 %v1547, %v1667
        %v1669 = vpop.f32.mrb[0].mxu0
        %1670 = vmatprep.mubr.bf16.mxu0 0
        %1671 = vmatmul.mubr.bf16.gmra.mrb[0].mxu0 %v957
        %v1672 = vpop.f32.mrb[0].mxu0
        %v1673 = vadd.f32 %v1552, %v1672
        %v1674 = vpop.f32.mrb[0].mxu0
        %v1675 = vpop.f32.mrb[0].mxu0
        %v1676 = vadd.f32 %v1555, %v1675
        %v1677 = vpop.f32.mrb[0].mxu0
        %1678 = vmatprep.mubr.bf16.mxu0 0
        %1679 = vmatmul.mubr.bf16.gmra.mrb[0].mxu0 %v960
        %v1680 = vpop.f32.mrb[0].mxu0
        %v1681 = vadd.f32 %v1560, %v1680
        %v1682 = vpop.f32.mrb[0].mxu0
        %v1683 = vpop.f32.mrb[0].mxu0
        %v1684 = vadd.f32 %v1563, %v1683
        %v1685 = vpop.f32.mrb[0].mxu0
        %1686 = vmatprep.mubr.bf16.mxu0 0
        %1687 = vmatmul.mubr.bf16.gmra.mrb[0].mxu0 %v963
        %v1688 = vpop.f32.mrb[0].mxu0
        %v1689 = vadd.f32 %v1568, %v1688
        %v1690 = vpop.f32.mrb[0].mxu0
        %v1691 = vpop.f32.mrb[0].mxu0
        %v1692 = vadd.f32 %v1571, %v1691
        %v1693 = vpop.f32.mrb[0].mxu0
        %1694 = vmatprep.mubr.bf16.mxu0 0
        %1695 = vmatmul.mubr.bf16.gmra.mrb[0].mxu0 %v966
        %v1696 = vpop.f32.mrb[0].mxu0
        %v1697 = vadd.f32 %v1576, %v1696
        %v1698 = vpop.f32.mrb[0].mxu0
        %v1699 = vpop.f32.mrb[0].mxu0
        %v1700 = vadd.f32 %v1579, %v1699
        %v1701 = vpop.f32.mrb[0].mxu0
        %1702 = vmatprep.mubr.bf16.mxu0 0
        %1703 = vmatmul.mubr.bf16.gmra.mrb[0].mxu0 %v969
        %v1704 = vpop.f32.mrb[0].mxu0
        %v1705 = vadd.f32 %v1584, %v1704
        %v1706 = vpop.f32.mrb[0].mxu0
        %v1707 = vpop.f32.mrb[0].mxu0
        %v1708 = vadd.f32 %v1587, %v1707
        %v1709 = vpop.f32.mrb[0].mxu0
        %1710 = vdwg.mxu0
        %v1711 = vld [vmem:[%s5] sm:$0x1]
        %v1713 = vlaneseq
        %v1714 = vshrl.u32 %v1713, 7
        %v1715 = vsub.s32 0, %v1714
        %v1716 = vrot.slane %v1711, %v1715
        %v1718 = vadd.f32 %v1649, %v1716
        %v1719 = vadd.f32 %v1652, %v1716
        %v1720 = vadd.f32 %v1657, %v1716
        %v1721 = vadd.f32 %v1660, %v1716
        %v1722 = vadd.f32 %v1665, %v1716
        %v1723 = vadd.f32 %v1668, %v1716
        %v1724 = vadd.f32 %v1673, %v1716
        %v1725 = vadd.f32 %v1676, %v1716
        %v1726 = vadd.f32 %v1681, %v1716
        %v1727 = vadd.f32 %v1684, %v1716
        %v1728 = vadd.f32 %v1689, %v1716
        %v1729 = vadd.f32 %v1692, %v1716
        %v1730 = vadd.f32 %v1697, %v1716
        %v1731 = vadd.f32 %v1700, %v1716
        %v1732 = vadd.f32 %v1705, %v1716
        %v1733 = vadd.f32 %v1708, %v1716
        %v1734 = vmul.f32 %v1718, %v483
        %v1735 = vmul.f32 %v1719, %v484
        %v1736 = vmul.f32 %v1720, %v485
        %v1737 = vmul.f32 %v1721, %v486
        %v1738 = vmul.f32 %v1722, %v487
        %v1739 = vmul.f32 %v1723, %v488
        %v1740 = vmul.f32 %v1724, %v489
        %v1741 = vmul.f32 %v1725, %v490
        %v1742 = vmul.f32 %v1726, %v491
        %v1743 = vmul.f32 %v1727, %v492
        %v1744 = vmul.f32 %v1728, %v493
        %v1745 = vmul.f32 %v1729, %v494
        %v1746 = vmul.f32 %v1730, %v495
        %v1747 = vmul.f32 %v1731, %v496
        %v1748 = vmul.f32 %v1732, %v497
        %v1749 = vmul.f32 %v1733, %v498
        %v1750 = vmax.f32 %v1734, 0.0
        %v1751 = vmax.f32 %v1735, 0.0
        %v1752 = vmax.f32 %v1736, 0.0
        %v1753 = vmax.f32 %v1737, 0.0
        %v1754 = vmax.f32 %v1738, 0.0
        %v1755 = vmax.f32 %v1739, 0.0
        %v1756 = vmax.f32 %v1740, 0.0
        %v1757 = vmax.f32 %v1741, 0.0
        %v1758 = vmax.f32 %v1742, 0.0
        %v1759 = vmax.f32 %v1743, 0.0
        %v1760 = vmax.f32 %v1744, 0.0
        %v1761 = vmax.f32 %v1745, 0.0
        %v1762 = vmax.f32 %v1746, 0.0
        %v1763 = vmax.f32 %v1747, 0.0
        %v1764 = vmax.f32 %v1748, 0.0
        %v1765 = vmax.f32 %v1749, 0.0
        %v1766 = vld [vmem:[%s6] sm:$0xf]
        %v1767 = vld [vmem:[%s6 + $0x4] sm:$0xf]
        %v1768 = vld [vmem:[%s6 + $0x8] sm:$0xf]
        %v1769 = vld [vmem:[%s6 + $0xc] sm:$0xf]
        %v1770 = vld [vmem:[%s6 + $0x10] sm:$0xf]
        %v1771 = vld [vmem:[%s6 + $0x14] sm:$0xf]
        %v1772 = vld [vmem:[%s6 + $0x18] sm:$0xf]
        %v1773 = vld [vmem:[%s6 + $0x1c] sm:$0xf]
        %v1774 = vadd.f32 %v1084, %v386
        %v1775 = vadd.f32 %v1085, %v387
        %v1776 = vadd.f32 %v1086, %v388
        %v1777 = vadd.f32 %v1087, %v389
        %v1778 = vadd.f32 %v1088, %v390
        %v1779 = vadd.f32 %v1089, %v391
        %v1780 = vadd.f32 %v1090, %v392
        %v1781 = vadd.f32 %v1091, %v393
        %v1782 = vadd.f32 %v1092, %v394
        %v1783 = vadd.f32 %v1093, %v395
        %v1784 = vadd.f32 %v1094, %v396
        %v1785 = vadd.f32 %v1095, %v397
        %v1786 = vadd.f32 %v1096, %v398
        %v1787 = vadd.f32 %v1097, %v399
        %v1788 = vadd.f32 %v1098, %v400
        %v1789 = vadd.f32 %v1099, %v401
        %v1790 = vpack.c.bf16 %v1775, %v1774
        %v1791 = vpack.c.bf16 %v1777, %v1776
        %v1792 = vpack.c.bf16 %v1779, %v1778
        %v1793 = vpack.c.bf16 %v1781, %v1780
        %v1794 = vpack.c.bf16 %v1783, %v1782
        %v1795 = vpack.c.bf16 %v1785, %v1784
        %v1796 = vpack.c.bf16 %v1787, %v1786
        %v1797 = vpack.c.bf16 %v1789, %v1788
        %1814 = vrot.lane.b32.xlu0 %v386, 96
        %v1815 = vpop.permute.xlu0 %1814
        %1816 = vrot.lane.b32.xlu0 %v387, 96
        %v1817 = vpop.permute.xlu0 %1816
        %1818 = vrot.lane.b32.xlu0 %v388, 96
        %v1819 = vpop.permute.xlu0 %1818
        %1820 = vrot.lane.b32.xlu0 %v389, 96
        %v1821 = vpop.permute.xlu0 %1820
        %1822 = vrot.lane.b32.xlu0 %v390, 96
        %v1823 = vpop.permute.xlu0 %1822
        %1824 = vrot.lane.b32.xlu0 %v391, 96
        %v1825 = vpop.permute.xlu0 %1824
        %1826 = vrot.lane.b32.xlu0 %v392, 96
        %v1827 = vpop.permute.xlu0 %1826
        %1828 = vrot.lane.b32.xlu0 %v393, 96
        %v1829 = vpop.permute.xlu0 %1828
        %1830 = vrot.lane.b32.xlu0 %v394, 96
        %v1831 = vpop.permute.xlu0 %1830
        %1832 = vrot.lane.b32.xlu0 %v395, 96
        %v1833 = vpop.permute.xlu0 %1832
        %1834 = vrot.lane.b32.xlu0 %v396, 96
        %v1835 = vpop.permute.xlu0 %1834
        %1836 = vrot.lane.b32.xlu0 %v397, 96
        %v1837 = vpop.permute.xlu0 %1836
        %1838 = vrot.lane.b32.xlu0 %v398, 96
        %v1839 = vpop.permute.xlu0 %1838
        %1840 = vrot.lane.b32.xlu0 %v399, 96
        %v1841 = vpop.permute.xlu0 %1840
        %1842 = vrot.lane.b32.xlu0 %v400, 96
        %v1843 = vpop.permute.xlu0 %1842
        %1844 = vrot.lane.b32.xlu0 %v401, 96
        %v1845 = vpop.permute.xlu0 %1844
        %v1862 = vadd.f32 %v1750, %v1815
        %v1863 = vadd.f32 %v1751, %v1817
        %v1864 = vadd.f32 %v1752, %v1819
        %v1865 = vadd.f32 %v1753, %v1821
        %v1866 = vadd.f32 %v1754, %v1823
        %v1867 = vadd.f32 %v1755, %v1825
        %v1868 = vadd.f32 %v1756, %v1827
        %v1869 = vadd.f32 %v1757, %v1829
        %v1870 = vadd.f32 %v1758, %v1831
        %v1871 = vadd.f32 %v1759, %v1833
        %v1872 = vadd.f32 %v1760, %v1835
        %v1873 = vadd.f32 %v1761, %v1837
        %v1874 = vadd.f32 %v1762, %v1839
        %v1875 = vadd.f32 %v1763, %v1841
        %v1876 = vadd.f32 %v1764, %v1843
        %v1877 = vadd.f32 %v1765, %v1845
        %v1878 = vpack.c.bf16 %v1863, %v1862
        %v1879 = vpack.c.bf16 %v1865, %v1864
        %v1880 = vpack.c.bf16 %v1867, %v1866
        %v1881 = vpack.c.bf16 %v1869, %v1868
        %v1882 = vpack.c.bf16 %v1871, %v1870
        %v1883 = vpack.c.bf16 %v1873, %v1872
        %v1884 = vpack.c.bf16 %v1875, %v1874
        %v1885 = vpack.c.bf16 %v1877, %v1876
        %v1890 = vunpack.c.l.b16 %v1770
        %v1891 = vunpack.c.l.b16 %v1771
        %v1892 = vunpack.c.l.b16 %v1772
        %v1893 = vunpack.c.l.b16 %v1773
        %v1894 = vpack.c.b16 %v1891, %v1890
        %v1895 = vpack.c.b16 %v1893, %v1892
        %v1899 = vsel %vm1468, %v1878, 0
        %v1902 = vsel %vm1468, %v1879, 0
        %v1905 = vsel %vm1468, %v1880, 0
        %v1908 = vsel %vm1468, %v1881, 0
        %v1911 = vsel %vm1468, %v1882, 0
        %v1914 = vsel %vm1468, %v1883, 0
        %v1917 = vsel %vm1468, %v1884, 0
        %v1920 = vsel %vm1468, %v1885, 0
        %1922 = vmatprep.subr.bf16.mxu0 0
        %1923 = vmatpush1.bf16.msra.mxu0 %v1894
        %1924 = vmatprep.subr.bf16.mxu0 0
        %1925 = vmatpush1.bf16.msra.mxu0 %v1895
        %1926 = vmatprep.subr.bf16.mxu0 0
        %1927 = vmatpush1.bf16.msra.mxu0 0
        %1928 = vmatprep.subr.bf16.mxu0 0
        %1929 = vmatpush1.bf16.msra.mxu0 0
        %1930 = vmatprep.subr.bf16.mxu0 0
        %1931 = vmatpush1.bf16.msra.mxu0 0
        %1932 = vmatprep.subr.bf16.mxu0 0
        %1933 = vmatpush1.bf16.msra.mxu0 0
        %1934 = vmatprep.subr.bf16.mxu0 0
        %1935 = vmatpush1.bf16.msra.mxu0 0
        %1936 = vmatprep.subr.bf16.mxu0 0
        %1937 = vmatpush1.bf16.msra.mxu0 0
        %1938 = vmatprep.subr.bf16.mxu0 0
        %1939 = vmatpush1.bf16.msra.mxu0 0
        %1940 = vmatprep.subr.bf16.mxu0 0
        %1941 = vmatpush1.bf16.msra.mxu0 0
        %1942 = vmatprep.subr.bf16.mxu0 0
        %1943 = vmatpush1.bf16.msra.mxu0 0
        %1944 = vmatprep.subr.bf16.mxu0 0
        %1945 = vmatpush1.bf16.msra.mxu0 0
        %1946 = vmatprep.subr.bf16.mxu0 0
        %1947 = vmatpush1.bf16.msra.mxu0 0
        %1948 = vmatprep.subr.bf16.mxu0 0
        %1949 = vmatpush1.bf16.msra.mxu0 0
        %1950 = vmatprep.subr.bf16.mxu0 0
        %1951 = vmatpush1.bf16.msra.mxu0 0
        %1952 = vmatprep.subr.bf16.mxu0 0
        %1953 = vmatpush1.bf16.msra.mxu0 0
        %1954 = vmatprep.mubr.bf16.mxu0 0
        %1955 = vmatmul.mubr.bf16.gmra.mrb[0].mxu0 %v1899
        %v1956 = vpop.f32.mrb[0].mxu0
        %v1957 = vadd.f32 0.0, %v1956
        %v1958 = vpop.f32.mrb[0].mxu0
        %v1959 = vpop.f32.mrb[0].mxu0
        %v1960 = vadd.f32 0.0, %v1959
        %v1961 = vpop.f32.mrb[0].mxu0
        %1962 = vmatprep.mubr.bf16.mxu0 0
        %1963 = vmatmul.mubr.bf16.gmra.mrb[0].mxu0 %v1902
        %v1964 = vpop.f32.mrb[0].mxu0
        %v1965 = vadd.f32 0.0, %v1964
        %v1966 = vpop.f32.mrb[0].mxu0
        %v1967 = vpop.f32.mrb[0].mxu0
        %v1968 = vadd.f32 0.0, %v1967
        %v1969 = vpop.f32.mrb[0].mxu0
        %1970 = vmatprep.mubr.bf16.mxu0 0
        %1971 = vmatmul.mubr.bf16.gmra.mrb[0].mxu0 %v1905
        %v1972 = vpop.f32.mrb[0].mxu0
        %v1973 = vadd.f32 0.0, %v1972
        %v1974 = vpop.f32.mrb[0].mxu0
        %v1975 = vpop.f32.mrb[0].mxu0
        %v1976 = vadd.f32 0.0, %v1975
        %v1977 = vpop.f32.mrb[0].mxu0
        %1978 = vmatprep.mubr.bf16.mxu0 0
        %1979 = vmatmul.mubr.bf16.gmra.mrb[0].mxu0 %v1908
        %v1980 = vpop.f32.mrb[0].mxu0
        %v1981 = vadd.f32 0.0, %v1980
        %v1982 = vpop.f32.mrb[0].mxu0
        %v1983 = vpop.f32.mrb[0].mxu0
        %v1984 = vadd.f32 0.0, %v1983
        %v1985 = vpop.f32.mrb[0].mxu0
        %1986 = vmatprep.mubr.bf16.mxu0 0
        %1987 = vmatmul.mubr.bf16.gmra.mrb[0].mxu0 %v1911
        %v1988 = vpop.f32.mrb[0].mxu0
        %v1989 = vadd.f32 0.0, %v1988
        %v1990 = vpop.f32.mrb[0].mxu0
        %v1991 = vpop.f32.mrb[0].mxu0
        %v1992 = vadd.f32 0.0, %v1991
        %v1993 = vpop.f32.mrb[0].mxu0
        %1994 = vmatprep.mubr.bf16.mxu0 0
        %1995 = vmatmul.mubr.bf16.gmra.mrb[0].mxu0 %v1914
        %v1996 = vpop.f32.mrb[0].mxu0
        %v1997 = vadd.f32 0.0, %v1996
        %v1998 = vpop.f32.mrb[0].mxu0
        %v1999 = vpop.f32.mrb[0].mxu0
        %v2000 = vadd.f32 0.0, %v1999
        %v2001 = vpop.f32.mrb[0].mxu0
        %2002 = vmatprep.mubr.bf16.mxu0 0
        %2003 = vmatmul.mubr.bf16.gmra.mrb[0].mxu0 %v1917
        %v2004 = vpop.f32.mrb[0].mxu0
        %v2005 = vadd.f32 0.0, %v2004
        %v2006 = vpop.f32.mrb[0].mxu0
        %v2007 = vpop.f32.mrb[0].mxu0
        %v2008 = vadd.f32 0.0, %v2007
        %v2009 = vpop.f32.mrb[0].mxu0
        %2010 = vmatprep.mubr.bf16.mxu0 0
        %2011 = vmatmul.mubr.bf16.gmra.mrb[0].mxu0 %v1920
        %v2012 = vpop.f32.mrb[0].mxu0
        %v2013 = vadd.f32 0.0, %v2012
        %v2014 = vpop.f32.mrb[0].mxu0
        %v2015 = vpop.f32.mrb[0].mxu0
        %v2016 = vadd.f32 0.0, %v2015
        %v2017 = vpop.f32.mrb[0].mxu0
        %2018 = vdwg.mxu0
        %v2023 = vunpack.c.l.b16 %v1766
        %v2024 = vunpack.c.l.b16 %v1767
        %v2025 = vunpack.c.l.b16 %v1768
        %v2026 = vunpack.c.l.b16 %v1769
        %v2027 = vpack.c.b16 %v2024, %v2023
        %v2028 = vpack.c.b16 %v2026, %v2025
        %v2032 = vsel %vm1468, %v1790, 0
        %v2035 = vsel %vm1468, %v1791, 0
        %v2038 = vsel %vm1468, %v1792, 0
        %v2041 = vsel %vm1468, %v1793, 0
        %v2044 = vsel %vm1468, %v1794, 0
        %v2047 = vsel %vm1468, %v1795, 0
        %v2050 = vsel %vm1468, %v1796, 0
        %v2053 = vsel %vm1468, %v1797, 0
        %2055 = vmatprep.subr.bf16.mxu0 0
        %2056 = vmatpush1.bf16.msra.mxu0 %v2027
        %2057 = vmatprep.subr.bf16.mxu0 0
        %2058 = vmatpush1.bf16.msra.mxu0 %v2028
        %2059 = vmatprep.subr.bf16.mxu0 0
        %2060 = vmatpush1.bf16.msra.mxu0 0
        %2061 = vmatprep.subr.bf16.mxu0 0
        %2062 = vmatpush1.bf16.msra.mxu0 0
        %2063 = vmatprep.subr.bf16.mxu0 0
        %2064 = vmatpush1.bf16.msra.mxu0 0
        %2065 = vmatprep.subr.bf16.mxu0 0
        %2066 = vmatpush1.bf16.msra.mxu0 0
        %2067 = vmatprep.subr.bf16.mxu0 0
        %2068 = vmatpush1.bf16.msra.mxu0 0
        %2069 = vmatprep.subr.bf16.mxu0 0
        %2070 = vmatpush1.bf16.msra.mxu0 0
        %2071 = vmatprep.subr.bf16.mxu0 0
        %2072 = vmatpush1.bf16.msra.mxu0 0
        %2073 = vmatprep.subr.bf16.mxu0 0
        %2074 = vmatpush1.bf16.msra.mxu0 0
        %2075 = vmatprep.subr.bf16.mxu0 0
        %2076 = vmatpush1.bf16.msra.mxu0 0
        %2077 = vmatprep.subr.bf16.mxu0 0
        %2078 = vmatpush1.bf16.msra.mxu0 0
        %2079 = vmatprep.subr.bf16.mxu0 0
        %2080 = vmatpush1.bf16.msra.mxu0 0
        %2081 = vmatprep.subr.bf16.mxu0 0
        %2082 = vmatpush1.bf16.msra.mxu0 0
        %2083 = vmatprep.subr.bf16.mxu0 0
        %2084 = vmatpush1.bf16.msra.mxu0 0
        %2085 = vmatprep.subr.bf16.mxu0 0
        %2086 = vmatpush1.bf16.msra.mxu0 0
        %2087 = vmatprep.mubr.bf16.mxu0 0
        %2088 = vmatmul.mubr.bf16.gmra.mrb[0].mxu0 %v2032
        %v2089 = vpop.f32.mrb[0].mxu0
        %v2090 = vadd.f32 %v1957, %v2089
        %v2091 = vpop.f32.mrb[0].mxu0
        %v2092 = vpop.f32.mrb[0].mxu0
        %v2093 = vadd.f32 %v1960, %v2092
        %v2094 = vpop.f32.mrb[0].mxu0
        %2095 = vmatprep.mubr.bf16.mxu0 0
        %2096 = vmatmul.mubr.bf16.gmra.mrb[0].mxu0 %v2035
        %v2097 = vpop.f32.mrb[0].mxu0
        %v2098 = vadd.f32 %v1965, %v2097
        %v2099 = vpop.f32.mrb[0].mxu0
        %v2100 = vpop.f32.mrb[0].mxu0
        %v2101 = vadd.f32 %v1968, %v2100
        %v2102 = vpop.f32.mrb[0].mxu0
        %2103 = vmatprep.mubr.bf16.mxu0 0
        %2104 = vmatmul.mubr.bf16.gmra.mrb[0].mxu0 %v2038
        %v2105 = vpop.f32.mrb[0].mxu0
        %v2106 = vadd.f32 %v1973, %v2105
        %v2107 = vpop.f32.mrb[0].mxu0
        %v2108 = vpop.f32.mrb[0].mxu0
        %v2109 = vadd.f32 %v1976, %v2108
        %v2110 = vpop.f32.mrb[0].mxu0
        %2111 = vmatprep.mubr.bf16.mxu0 0
        %2112 = vmatmul.mubr.bf16.gmra.mrb[0].mxu0 %v2041
        %v2113 = vpop.f32.mrb[0].mxu0
        %v2114 = vadd.f32 %v1981, %v2113
        %v2115 = vpop.f32.mrb[0].mxu0
        %v2116 = vpop.f32.mrb[0].mxu0
        %v2117 = vadd.f32 %v1984, %v2116
        %v2118 = vpop.f32.mrb[0].mxu0
        %2119 = vmatprep.mubr.bf16.mxu0 0
        %2120 = vmatmul.mubr.bf16.gmra.mrb[0].mxu0 %v2044
        %v2121 = vpop.f32.mrb[0].mxu0
        %v2122 = vadd.f32 %v1989, %v2121
        %v2123 = vpop.f32.mrb[0].mxu0
        %v2124 = vpop.f32.mrb[0].mxu0
        %v2125 = vadd.f32 %v1992, %v2124
        %v2126 = vpop.f32.mrb[0].mxu0
        %2127 = vmatprep.mubr.bf16.mxu0 0
        %2128 = vmatmul.mubr.bf16.gmra.mrb[0].mxu0 %v2047
        %v2129 = vpop.f32.mrb[0].mxu0
        %v2130 = vadd.f32 %v1997, %v2129
        %v2131 = vpop.f32.mrb[0].mxu0
        %v2132 = vpop.f32.mrb[0].mxu0
        %v2133 = vadd.f32 %v2000, %v2132
        %v2134 = vpop.f32.mrb[0].mxu0
        %2135 = vmatprep.mubr.bf16.mxu0 0
        %2136 = vmatmul.mubr.bf16.gmra.mrb[0].mxu0 %v2050
        %v2137 = vpop.f32.mrb[0].mxu0
        %v2138 = vadd.f32 %v2005, %v2137
        %v2139 = vpop.f32.mrb[0].mxu0
        %v2140 = vpop.f32.mrb[0].mxu0
        %v2141 = vadd.f32 %v2008, %v2140
        %v2142 = vpop.f32.mrb[0].mxu0
        %2143 = vmatprep.mubr.bf16.mxu0 0
        %2144 = vmatmul.mubr.bf16.gmra.mrb[0].mxu0 %v2053
        %v2145 = vpop.f32.mrb[0].mxu0
        %v2146 = vadd.f32 %v2013, %v2145
        %v2147 = vpop.f32.mrb[0].mxu0
        %v2148 = vpop.f32.mrb[0].mxu0
        %v2149 = vadd.f32 %v2016, %v2148
        %v2150 = vpop.f32.mrb[0].mxu0
        %2151 = vdwg.mxu0
        %v2152 = vld [vmem:[%s7] sm:$0x1]
        %v2154 = vlaneseq
        %v2155 = vshrl.u32 %v2154, 7
        %v2156 = vsub.s32 0, %v2155
        %v2157 = vrot.slane %v2152, %v2156
        %v2159 = vadd.f32 %v2090, %v2157
        %v2160 = vadd.f32 %v2093, %v2157
        %v2161 = vadd.f32 %v2098, %v2157
        %v2162 = vadd.f32 %v2101, %v2157
        %v2163 = vadd.f32 %v2106, %v2157
        %v2164 = vadd.f32 %v2109, %v2157
        %v2165 = vadd.f32 %v2114, %v2157
        %v2166 = vadd.f32 %v2117, %v2157
        %v2167 = vadd.f32 %v2122, %v2157
        %v2168 = vadd.f32 %v2125, %v2157
        %v2169 = vadd.f32 %v2130, %v2157
        %v2170 = vadd.f32 %v2133, %v2157
        %v2171 = vadd.f32 %v2138, %v2157
        %v2172 = vadd.f32 %v2141, %v2157
        %v2173 = vadd.f32 %v2146, %v2157
        %v2174 = vadd.f32 %v2149, %v2157
        %2175 = vst [vmem:[%s365] sm:$0xff] %v2159
        %2176 = vst [vmem:[%s365 + $0x8] sm:$0xff] %v2160
        %2177 = vst [vmem:[%s365 + $0x10] sm:$0xff] %v2161
        %2178 = vst [vmem:[%s365 + $0x18] sm:$0xff] %v2162
        %2179 = vst [vmem:[%s365 + $0x20] sm:$0xff] %v2163
        %2180 = vst [vmem:[%s365 + $0x28] sm:$0xff] %v2164
        %2181 = vst [vmem:[%s365 + $0x30] sm:$0xff] %v2165
        %2182 = vst [vmem:[%s365 + $0x38] sm:$0xff] %v2166
        %2183 = vst [vmem:[%s365 + $0x40] sm:$0xff] %v2167
        %2184 = vst [vmem:[%s365 + $0x48] sm:$0xff] %v2168
        %2185 = vst [vmem:[%s365 + $0x50] sm:$0xff] %v2169
        %2186 = vst [vmem:[%s365 + $0x58] sm:$0xff] %v2170
        %2187 = vst [vmem:[%s365 + $0x60] sm:$0xff] %v2171
        %2188 = vst [vmem:[%s365 + $0x68] sm:$0xff] %v2172
        %2189 = vst [vmem:[%s365 + $0x70] sm:$0xff] %v2173
        %2190 = vst [vmem:[%s365 + $0x78] sm:$0xff] %v2174
        %s2191 = sand.u32 %s214, 1
        %s2192 = scalar_lea.sflag [#allocation4], %s2191
        %s2193 = sand.u32 %s214, 1
        %s2194 = smul.addr %s2193, 128
        %s2195 = scalar_lea.vmem [#allocation7], %s2194
        // Predicated region
        $region61: #{tpu_custom_call.1} parent=51 // pred_check
          %p2196 = pneg %p224
        $region62: #{tpu_custom_call.1} parent=51 // pred_check_branch
          %2198 = sbr.rel (%p2196) target = $region64
        $region63: #{tpu_custom_call.1} parent=51 // pred_region
          %s2199 = smul.u32 16, %s28
          %s2201 = ssub.s32 2048, 2048
          %2202 = vsyncadd %s2192, %s2201
          %s2203 = smul.addr %s2199, 128
          %s2204 = scalar_lea.hbm %s8, %s2203
          %s2205 = sshll.u32 %s2195, 4
          %s2206 = int_to_ptr.vmem [resolvable:$true] %s2205
          %2211 = dma.vmem_to_hbm [thread:$0]  %s2206, 2048, %s2204, %s2192, 128, 128, 8
        $region64: #{tpu_custom_call.1} parent=51 // pred_fallthru
          _
      $region52: #{tpu_custom_call.1} parent=5 // pred_fallthru
        _
      %p2212 = scmp.le.s32.totalorder 2, %s23
      // Predicated region
      $region65: #{tpu_custom_call.1} parent=5 // pred_check
        %p2213 = pneg %p2212
      $region66: #{tpu_custom_call.1} parent=5 // pred_check_branch
        %2215 = sbr.rel (%p2213) target = $region68
      $region67: #{tpu_custom_call.1} parent=5 // pred_region
        %s2216 = ssub.s32 %s23, 2
        // Predicated region
        $region69: #{tpu_custom_call.1} parent=67 // pred_check
          %p2217 = pneg %p230
        $region70: #{tpu_custom_call.1} parent=67 // pred_check_branch
          %2219 = sbr.rel (%p2217) target = $region72
        $region71: #{tpu_custom_call.1} parent=67 // pred_region
          %s2220 = sand.u32 %s215, 1
          %s2221 = scalar_lea.sflag [#allocation4], %s2220
          %s2222 = sand.u32 %s215, 1
          %s2223 = smul.addr %s2222, 128
          %s2224 = scalar_lea.vmem [#allocation7], %s2223
          %2225 = dma.done %s2221, 2048
        $region72: #{tpu_custom_call.1} parent=67 // pred_fallthru
          _
      $region68: #{tpu_custom_call.1} parent=5 // pred_fallthru
        _
    $region6: #{tpu_custom_call.1} parent=1 // loop_footer
      %s27 = sadd.s32 1, %s23
    $region7: #{tpu_custom_call.1} parent=1 // loop_footer_branch
      %22 = sbr.rel target = $region3
    $region8: #{tpu_custom_call.1} parent=1 // loop_exit
      _
    %2226 = vsyncpa [#allocation3], 1
    %s2227 = scalar_lea.sflag [#allocation3], 1
    %2228 = vsyncpa %s2227, 1
    %2229 = vsyncpa [#allocation6], 1
    %s2230 = scalar_lea.sflag [#allocation6], 1
    %2231 = vsyncpa %s2230, 1
    %2232 = vsyncpa [#allocation4], 1
    %s2233 = scalar_lea.sflag [#allocation4], 1
    %2234 = vsyncpa %s2233, 1

</llo_original>
